<compile_context>
chip_gen: v7x
topology: tpu7x:2x2x1
jax: 0.10.0
libtpu: 0.0.40
codegen_flags: <defaults>
</compile_context>

<pallas_src>
import jax
import jax.numpy as jnp
from jax.experimental import pallas as pl
from jax.experimental.pallas import tpu as pltpu


# ---------------------------------------------------------------------------
# Fused kernel: base-LM forward + shifted cross-entropy (online logsumexp).
# Grid: (token tiles i  [parallel], vocab tiles j  [arbitrary / reduction]).
# ---------------------------------------------------------------------------
def fused_lm_ce_kernel(x_ref, wh_ref, wlm_ref, lab_ref,
                       hid_ref, logits_ref, loss_ref,
                       m_sc, l_sc, p_sc):
    j = pl.program_id(1)
    nj = pl.num_programs(1)
    tn = logits_ref.shape[-1]

    @pl.when(j == 0)
    def _init():
        # hidden = tanh(x @ W_h): computed once per token tile.  The bf16
        # hidden *output* block stays resident across the vocab sweep and
        # doubles as the MXU LHS for the lm-head matmul (no duplicate bf16
        # scratch, no f32 hidden writeback).
        h = jnp.tanh(jnp.dot(x_ref[...], wh_ref[...],
                             preferred_element_type=jnp.float32))
        hid_ref[...] = h.astype(hid_ref.dtype)
        m_sc[...] = jnp.full(m_sc.shape, -jnp.inf, jnp.float32)
        l_sc[...] = jnp.zeros(l_sc.shape, jnp.float32)
        p_sc[...] = jnp.zeros(p_sc.shape, jnp.float32)

    # logits tile for this (token tile, vocab tile): f32 in registers for the
    # fused CE, stored to HBM as bf16 (halves the dominant HBM writeback).
    logits = jnp.dot(hid_ref[...], wlm_ref[...],
                     preferred_element_type=jnp.float32)
    logits_ref[...] = logits.astype(logits_ref.dtype)

    # Fused shifted cross-entropy: online logsumexp + true-class logit pick.
    # Compare the *local* lane iota against (label - j*TN): saves a full-tile
    # int add per vocab tile vs. building a global-column iota.
    loc = lab_ref[...] - j * tn                              # (TM, 1) int32
    col = jax.lax.broadcasted_iota(jnp.int32, logits.shape, 1)
    p_sc[...] += jnp.sum(jnp.where(col == loc, logits, 0.0),
                         axis=-1, keepdims=True)
    m_new = jnp.maximum(m_sc[...], jnp.max(logits, axis=-1, keepdims=True))
    l_sc[...] = (l_sc[...] * jnp.exp(m_sc[...] - m_new)
                 + jnp.sum(jnp.exp(logits - m_new), axis=-1, keepdims=True))
    m_sc[...] = m_new

    @pl.when(j == nj - 1)
    def _finalize():
        lse = m_sc[...] + jnp.log(l_sc[...])
        valid = (lab_ref[...] >= 0).astype(jnp.float32)  # label -1 => no loss
        part = jnp.sum(valid * (lse - p_sc[...]))
        loss_ref[...] = jnp.full(loss_ref.shape, part, jnp.float32)


def _round_up(n, m):
    return ((n + m - 1) // m) * m


# ---------------------------------------------------------------------------
# Wrapper: MemoryCell.forward -> (logits, loss, new_memory_state).
# ---------------------------------------------------------------------------
def memory_cell_forward(input_ids, memory, emb_table, w_hidden, w_lm,
                        memory_state=None, *, tm=512, tn=1024,
                        vmem_limit_bytes=56 * 1024 * 1024):
    """MemoryCell.forward as one fused Pallas call.

    tm / tn are token-/vocab-tile sizes (keep them multiples of 256 on
    v6e/v7x — 256-wide MXU — and 128 on v5e).  Defaults target v7x's 64 MiB
    physical VMEM; on v5e/v6e (128 MiB VMEM) raise tm to ~768-1024, tn to
    ~1024-2048 and vmem_limit_bytes to ~96-112 MiB so the per-token-tile
    W_lm re-stream (arithmetic intensity ~ tm FLOP/byte) stays above the
    HBM ridge (~640 on v6e, ~310 on v7x, ~240 on v5e).
    """
    b, s = input_ids.shape
    m, d = memory.shape
    v = w_lm.shape[1]
    assert d % 128 == 0, "hidden dim must be lane-dense (multiple of 128)"

    # ---- set_memory / process_input (glue) --------------------------------
    if memory_state is None:
        memory_state = jnp.broadcast_to(memory[None], (b, m, d))
    # The synthetic frozen base model is strictly per-token, so the memory
    # rows prepended by process_input cannot influence the real-token rows,
    # and process_output strips them immediately.  The kernel therefore runs
    # only over the B*S real-token rows (saves writing B*M*V discarded logits
    # and the XLA [:, m:] slice copy).
    # TODO(synk): with an attention-based base model the memory rows must be
    # part of the kernel's sequence (and memory_state would then matter).
    del memory_state, m

    # Frozen weights / embedding table are consumed as bf16; cast only if the
    # caller did not already pass bf16 copies (avoids a per-call D*(D+V)
    # cast round trip in HBM).
    if emb_table.dtype != jnp.bfloat16:
        emb_table = emb_table.astype(jnp.bfloat16)
    if w_hidden.dtype != jnp.bfloat16:
        w_hidden = w_hidden.astype(jnp.bfloat16)
    if w_lm.dtype != jnp.bfloat16:
        w_lm = w_lm.astype(jnp.bfloat16)

    # Embedding lookup (XLA gather) straight out of the bf16 table.
    # TODO(synk): fold the gather in-kernel (scalar-prefetched ids + manual
    # DMA row gather on emb_table) to remove this HBM round trip entirely.
    x = jnp.take(emb_table, input_ids, axis=0).reshape(b * s, d)

    # Shifted labels; -1 marks rows that take no loss (last token per seq).
    labels = jnp.concatenate(
        [input_ids[:, 1:], jnp.full((b, 1), -1, input_ids.dtype)], axis=1)
    labels = labels.reshape(b * s, 1).astype(jnp.int32)

    # ---- tiling ------------------------------------------------------------
    t = b * s
    # bf16 packs 16 rows per sublane tile -> token tile must be a multiple
    # of 16.
    tm_eff = min(_round_up(tm, 16), _round_up(t, 16))
    # Ensure >= 2 token tiles so the "parallel" token axis really splits
    # across v7x's two TensorCores at small token counts.
    if t > 16 and _round_up(t, tm_eff) // tm_eff < 2:
        tm_eff = max(16, _round_up(pl.cdiv(t, 2), 16))
    t_pad = _round_up(t, tm_eff)

    tn_eff = min(tn, v)
    assert tn_eff % 128 == 0 and v % tn_eff == 0, "vocab must tile by 128"
    # NOTE: if vocab padding is ever added, padded W_lm columns must be
    # masked to -inf before the max/exp or the online logsumexp is corrupted.

    if t_pad != t:
        x = jnp.concatenate([x, jnp.zeros((t_pad - t, d), x.dtype)], axis=0)
        labels = jnp.concatenate(
            [labels, jnp.full((t_pad - t, 1), -1, jnp.int32)], axis=0)

    grid_t = t_pad // tm_eff
    grid_v = v // tn_eff

    out_shapes = (
        jax.ShapeDtypeStruct((t_pad, d), jnp.bfloat16),         # hidden
        jax.ShapeDtypeStruct((t_pad, v), jnp.bfloat16),         # logits
        jax.ShapeDtypeStruct((grid_t * 8, 128), jnp.float32),   # loss parts
    )

    def _run(wh_spec):
        return pl.pallas_call(
            fused_lm_ce_kernel,
            out_shape=out_shapes,
            grid_spec=pltpu.PrefetchScalarGridSpec(
                num_scalar_prefetch=0,
                grid=(grid_t, grid_v),
                in_specs=[
                    pl.BlockSpec((tm_eff, d), lambda i, j: (i, 0)),       # x
                    wh_spec,                                              # W_h (resident)
                    pl.BlockSpec((d, tn_eff), lambda i, j: (0, j)),       # W_lm stream
                    pl.BlockSpec((tm_eff, 1), lambda i, j: (i, 0)),       # labels
                ],
                out_specs=(
                    pl.BlockSpec((tm_eff, d), lambda i, j: (i, 0)),       # hidden (resident over j)
                    pl.BlockSpec((tm_eff, tn_eff), lambda i, j: (i, j)),  # logits
                    pl.BlockSpec((8, 128), lambda i, j: (i, 0)),          # loss parts
                ),
                scratch_shapes=[
                    pltpu.VMEM((tm_eff, 1), jnp.float32),    # running max
                    pltpu.VMEM((tm_eff, 1), jnp.float32),    # running sum-exp
                    pltpu.VMEM((tm_eff, 1), jnp.float32),    # picked true logit
                ],
            ),
            compiler_params=pltpu.CompilerParams(
                # Token axis shards across v7x's 2 TensorCores; the vocab
                # axis carries the online-softmax state and stays sequential.
                dimension_semantics=("parallel", "arbitrary"),
                vmem_limit_bytes=vmem_limit_bytes,
            ),
        )(x, w_hidden, w_lm, labels)

    try:
        # W_h has a constant index_map, so a single VMEM copy suffices; on
        # v7x (64 MiB VMEM) single-buffering halves the largest resident
        # weight buffer at realistic D.
        wh_spec = pl.BlockSpec((d, d), lambda i, j: (0, 0),
                               pipeline_mode=pl.Buffered(1))
        outs = _run(wh_spec)
        jax.block_until_ready(outs)
    except Exception:
        # Fallback for Pallas builds that reject single-buffered inputs:
        # default (double-buffered) W_h BlockSpec, identical results.
        outs = _run(pl.BlockSpec((d, d), lambda i, j: (0, 0)))

    hidden_pad, logits_pad, loss_parts = outs
    hidden = hidden_pad[:t].reshape(b, s, d)
    logits = logits_pad[:t].reshape(b, s, v)
    # process_output: new_memory_state = hidden_states[-1][:, num_mem_tokens:]
    new_memory_state = hidden
    # CrossEntropyLoss default: mean over the B*(S-1) shifted targets.
    loss = jnp.sum(loss_parts[::8, 0]) / (b * (s - 1))
    return logits, loss, new_memory_state


# ---------------------------------------------------------------------------
# Pure-JAX reference (same bf16-matmul / f32-accumulate math) for checking.
# ---------------------------------------------------------------------------
def _reference_forward(input_ids, emb_table, w_hidden, w_lm):
    b, s = input_ids.shape
    d = emb_table.shape[1]
    v = w_lm.shape[1]
    x = jnp.take(emb_table.astype(jnp.bfloat16), input_ids,
                 axis=0).reshape(b * s, d)
    h = jnp.tanh(jnp.dot(x, w_hidden.astype(jnp.bfloat16),
                         preferred_element_type=jnp.float32))
    logits = jnp.dot(h.astype(jnp.bfloat16), w_lm.astype(jnp.bfloat16),
                     preferred_element_type=jnp.float32)
    logits = logits.reshape(b, s, v)
    hidden = h.reshape(b, s, d)
    shift_logits = logits[:, :-1].reshape(-1, v)
    labels = input_ids[:, 1:].reshape(-1)
    lse = jax.nn.logsumexp(shift_logits, axis=-1)
    picked = jnp.take_along_axis(shift_logits, labels[:, None], axis=-1)[:, 0]
    loss = jnp.mean(lse - picked)
    return logits, loss, hidden


if __name__ == "__main__":
    B, S, M, D, V = 2, 32, 4, 128, 512

    key = jax.random.PRNGKey(0)
    k_emb, k_mem, k_wh, k_wlm, k_ids = jax.random.split(key, 5)

    # Deterministic synthetic parameters (shapes implied by __init__/forward).
    emb_table = jax.random.normal(k_emb, (V, D), jnp.float32)
    # create_memory: memory = randn(M, D) * embeddings.weight.std()
    memory = jax.random.normal(k_mem, (M, D), jnp.float32) * jnp.std(emb_table)
    w_hidden = jax.random.normal(k_wh, (D, D), jnp.float32) / jnp.sqrt(D)
    w_lm = jax.random.normal(k_wlm, (D, V), jnp.float32) / jnp.sqrt(D)

    input_ids = jax.random.randint(k_ids, (B, S), 0, V, jnp.int32)

    # Frozen base-model weights cast to bf16 ONCE here (not per forward call).
    emb_bf16 = emb_table.astype(jnp.bfloat16)
    wh_bf16 = w_hidden.astype(jnp.bfloat16)
    wlm_bf16 = w_lm.astype(jnp.bfloat16)

    # Small tiles here just to exercise a 2x2 (token-tile, vocab-tile) grid.
    logits, loss, new_memory_state = memory_cell_forward(
        input_ids, memory, emb_bf16, wh_bf16, wlm_bf16, tm=32, tn=256)
    jax.block_until_ready((logits, loss, new_memory_state))

    assert logits.shape == (B, S, V)
    assert new_memory_state.shape == (B, S, D)
    assert loss.shape == ()

    # Correctness vs. pure-JAX reference.
    ref_logits, ref_loss, ref_hidden = _reference_forward(
        input_ids, emb_table, w_hidden, w_lm)
    assert jnp.allclose(logits.astype(jnp.float32), ref_logits,
                        atol=2e-2, rtol=2e-2)
    assert jnp.allclose(new_memory_state.astype(jnp.float32), ref_hidden,
                        atol=1e-2, rtol=1e-2)
    assert jnp.allclose(loss, ref_loss, atol=1e-2)

    print("KERNEL_OK")
</pallas_src>

<mosaic_0001>
module attributes {stable_mosaic.version = 11 : i64} {
  func.func @fused_lm_ce_kernel(%arg0: i32, %arg1: i32, %arg2: memref<32x128xbf16, #tpu.memory_space<vmem>>, %arg3: memref<128x128xbf16, #tpu.memory_space<vmem>>, %arg4: memref<128x256xbf16, #tpu.memory_space<vmem>>, %arg5: memref<32x1xi32, #tpu.memory_space<vmem>>, %arg6: memref<32x128xbf16, #tpu.memory_space<vmem>>, %arg7: memref<32x256xbf16, #tpu.memory_space<vmem>>, %arg8: memref<8x128xf32, #tpu.memory_space<vmem>>, %arg9: memref<32x1xf32, #tpu.memory_space<vmem>>, %arg10: memref<32x1xf32, #tpu.memory_space<vmem>>, %arg11: memref<32x1xf32, #tpu.memory_space<vmem>>) attributes {dimension_semantics = [#tpu.dimension_semantics<parallel>, #tpu.dimension_semantics<arbitrary>], iteration_bounds = array<i64: 2, 2>, scalar_prefetch = 0 : i64, scratch_operands = 3 : i64, tpu.core_type = #tpu.core_type<tc>, window_params = [{transform_indices = @transform_0, window_bounds = array<i64: 32, 128>}, {pipeline_mode = #tpu.pipeline_mode<synchronous>, transform_indices = @transform_1, window_bounds = array<i64: 128, 128>}, {transform_indices = @transform_2, window_bounds = array<i64: 128, 256>}, {transform_indices = @transform_3, window_bounds = array<i64: 32, 1>}, {transform_indices = @transform_4, window_bounds = array<i64: 32, 128>}, {transform_indices = @transform_5, window_bounds = array<i64: 32, 256>}, {transform_indices = @transform_6, window_bounds = array<i64: 8, 128>}]} {
    %c0_i32 = arith.constant 0 : i32
    %0 = arith.cmpi eq, %arg1, %c0_i32 : i32
    %1 = arith.extui %0 : i1 to i32
    %c0_i32_0 = arith.constant 0 : i32
    %2 = arith.cmpi ne, %1, %c0_i32_0 : i32
    scf.if %2 {
      %c0_27 = arith.constant 0 : index
      %c0_28 = arith.constant 0 : index
      %42 = vector.load %arg2[%c0_27, %c0_28] : memref<32x128xbf16, #tpu.memory_space<vmem>>, vector<32x128xbf16>
      %c0_29 = arith.constant 0 : index
      %c0_30 = arith.constant 0 : index
      %43 = vector.load %arg3[%c0_29, %c0_30] : memref<128x128xbf16, #tpu.memory_space<vmem>>, vector<128x128xbf16>
      %cst_31 = arith.constant dense<0.000000e+00> : vector<32x128xf32>
      %44 = tpu.matmul %42, %43, %cst_31 {dimension_numbers = #tpu.dot_dimension_numbers<[1], [0], [0], [1], [0, 0, 1, 1], [], []>} : vector<32x128xbf16>, vector<128x128xbf16>, vector<32x128xf32> -> vector<32x128xf32>
      %45 = math.tanh %44 : vector<32x128xf32>
      %46 = arith.truncf %45 : vector<32x128xf32> to vector<32x128xbf16>
      %c0_32 = arith.constant 0 : index
      %c0_33 = arith.constant 0 : index
      %47 = vector.load %arg6[%c0_32, %c0_33] : memref<32x128xbf16, #tpu.memory_space<vmem>>, vector<32x128xbf16>
      tpu.vector_store %arg6[%c0_32, %c0_33], %46 {strides = array<i32>} : memref<32x128xbf16, #tpu.memory_space<vmem>>, vector<32x128xbf16>,
      %cst_34 = arith.constant 0xFF800000 : f32
      %48 = vector.broadcast %cst_34 : f32 to vector<32x1xf32>
      %c0_35 = arith.constant 0 : index
      %c0_36 = arith.constant 0 : index
      %49 = vector.load %arg9[%c0_35, %c0_36] : memref<32x1xf32, #tpu.memory_space<vmem>>, vector<32x1xf32>
      tpu.vector_store %arg9[%c0_35, %c0_36], %48 {strides = array<i32>} : memref<32x1xf32, #tpu.memory_space<vmem>>, vector<32x1xf32>,
      %cst_37 = arith.constant 0.000000e+00 : f32
      %50 = vector.broadcast %cst_37 : f32 to vector<32x1xf32>
      %c0_38 = arith.constant 0 : index
      %c0_39 = arith.constant 0 : index
      %51 = vector.load %arg10[%c0_38, %c0_39] : memref<32x1xf32, #tpu.memory_space<vmem>>, vector<32x1xf32>
      tpu.vector_store %arg10[%c0_38, %c0_39], %50 {strides = array<i32>} : memref<32x1xf32, #tpu.memory_space<vmem>>, vector<32x1xf32>,
      %cst_40 = arith.constant 0.000000e+00 : f32
      %52 = vector.broadcast %cst_40 : f32 to vector<32x1xf32>
      %c0_41 = arith.constant 0 : index
      %c0_42 = arith.constant 0 : index
      %53 = vector.load %arg11[%c0_41, %c0_42] : memref<32x1xf32, #tpu.memory_space<vmem>>, vector<32x1xf32>
      tpu.vector_store %arg11[%c0_41, %c0_42], %52 {strides = array<i32>} : memref<32x1xf32, #tpu.memory_space<vmem>>, vector<32x1xf32>,
    } else {
    }
    %c0 = arith.constant 0 : index
    %c0_1 = arith.constant 0 : index
    %3 = vector.load %arg6[%c0, %c0_1] : memref<32x128xbf16, #tpu.memory_space<vmem>>, vector<32x128xbf16>
    %c0_2 = arith.constant 0 : index
    %c0_3 = arith.constant 0 : index
    %4 = vector.load %arg4[%c0_2, %c0_3] : memref<128x256xbf16, #tpu.memory_space<vmem>>, vector<128x256xbf16>
    %cst = arith.constant dense<0.000000e+00> : vector<32x256xf32>
    %5 = tpu.matmul %3, %4, %cst {dimension_numbers = #tpu.dot_dimension_numbers<[1], [0], [0], [1], [0, 0, 1, 1], [], []>} : vector<32x128xbf16>, vector<128x256xbf16>, vector<32x256xf32> -> vector<32x256xf32>
    %6 = arith.truncf %5 : vector<32x256xf32> to vector<32x256xbf16>
    %c0_4 = arith.constant 0 : index
    %c0_5 = arith.constant 0 : index
    %7 = vector.load %arg7[%c0_4, %c0_5] : memref<32x256xbf16, #tpu.memory_space<vmem>>, vector<32x256xbf16>
    tpu.vector_store %arg7[%c0_4, %c0_5], %6 {strides = array<i32>} : memref<32x256xbf16, #tpu.memory_space<vmem>>, vector<32x256xbf16>,
    %c0_6 = arith.constant 0 : index
    %c0_7 = arith.constant 0 : index
    %8 = vector.load %arg5[%c0_6, %c0_7] : memref<32x1xi32, #tpu.memory_space<vmem>>, vector<32x1xi32>
    %c256_i32 = arith.constant 256 : i32
    %9 = arith.muli %arg1, %c256_i32 : i32
    %10 = vector.broadcast %9 : i32 to vector<32x1xi32>
    %11 = arith.subi %8, %10 : vector<32x1xi32>
    %12 = tpu.iota {dimensions = array<i32: 1>} : vector<32x256xi32>
    %c0_8 = arith.constant 0 : index
    %c0_9 = arith.constant 0 : index
    %13 = vector.load %arg11[%c0_8, %c0_9] : memref<32x1xf32, #tpu.memory_space<vmem>>, vector<32x1xf32>
    %14 = vector.broadcast %11 : vector<32x1xi32> to vector<32x256xi32>
    %15 = arith.cmpi eq, %12, %14 : vector<32x256xi32>
    %cst_10 = arith.constant 0.000000e+00 : f32
    %16 = vector.broadcast %cst_10 : f32 to vector<32x256xf32>
    %17 = arith.select %15, %5, %16 : vector<32x256xi1>, vector<32x256xf32>
    %cst_11 = arith.constant dense<0.000000e+00> : vector<32xf32>
    %18 = vector.multi_reduction <add>, %17, %cst_11 [1] : vector<32x256xf32> to vector<32xf32>
    %19 = vector.shape_cast %18 : vector<32xf32> to vector<32x1xf32>
    %20 = arith.addf %13, %19 : vector<32x1xf32>
    %c0_12 = arith.constant 0 : index
    %c0_13 = arith.constant 0 : index
    %21 = vector.load %arg11[%c0_12, %c0_13] : memref<32x1xf32, #tpu.memory_space<vmem>>, vector<32x1xf32>
    tpu.vector_store %arg11[%c0_12, %c0_13], %20 {strides = array<i32>} : memref<32x1xf32, #tpu.memory_space<vmem>>, vector<32x1xf32>,
    %c0_14 = arith.constant 0 : index
    %c0_15 = arith.constant 0 : index
    %22 = vector.load %arg9[%c0_14, %c0_15] : memref<32x1xf32, #tpu.memory_space<vmem>>, vector<32x1xf32>
    %cst_16 = arith.constant dense<0xFF800000> : vector<32xf32>
    %23 = vector.multi_reduction <maximumf>, %5, %cst_16 [1] : vector<32x256xf32> to vector<32xf32>
    %24 = vector.shape_cast %23 : vector<32xf32> to vector<32x1xf32>
    %25 = arith.maximumf %22, %24 : vector<32x1xf32>
    %c0_17 = arith.constant 0 : index
    %c0_18 = arith.constant 0 : index
    %26 = vector.load %arg10[%c0_17, %c0_18] : memref<32x1xf32, #tpu.memory_space<vmem>>, vector<32x1xf32>
    %c0_19 = arith.constant 0 : index
    %c0_20 = arith.constant 0 : index
    %27 = vector.load %arg9[%c0_19, %c0_20] : memref<32x1xf32, #tpu.memory_space<vmem>>, vector<32x1xf32>
    %28 = arith.subf %27, %25 : vector<32x1xf32>
    %29 = math.exp %28 : vector<32x1xf32>
    %30 = arith.mulf %26, %29 : vector<32x1xf32>
    %31 = vector.broadcast %25 : vector<32x1xf32> to vector<32x256xf32>
    %32 = arith.subf %5, %31 : vector<32x256xf32>
    %33 = math.exp %32 : vector<32x256xf32>
    %cst_21 = arith.constant dense<0.000000e+00> : vector<32xf32>
    %34 = vector.multi_reduction <add>, %33, %cst_21 [1] : vector<32x256xf32> to vector<32xf32>
    %35 = vector.shape_cast %34 : vector<32xf32> to vector<32x1xf32>
    %36 = arith.addf %30, %35 : vector<32x1xf32>
    %c0_22 = arith.constant 0 : index
    %c0_23 = arith.constant 0 : index
    %37 = vector.load %arg10[%c0_22, %c0_23] : memref<32x1xf32, #tpu.memory_space<vmem>>, vector<32x1xf32>
    tpu.vector_store %arg10[%c0_22, %c0_23], %36 {strides = array<i32>} : memref<32x1xf32, #tpu.memory_space<vmem>>, vector<32x1xf32>,
    %c0_24 = arith.constant 0 : index
    %c0_25 = arith.constant 0 : index
    %38 = vector.load %arg9[%c0_24, %c0_25] : memref<32x1xf32, #tpu.memory_space<vmem>>, vector<32x1xf32>
    tpu.vector_store %arg9[%c0_24, %c0_25], %25 {strides = array<i32>} : memref<32x1xf32, #tpu.memory_space<vmem>>, vector<32x1xf32>,
    %c1_i32 = arith.constant 1 : i32
    %39 = arith.cmpi eq, %arg1, %c1_i32 : i32
    %40 = arith.extui %39 : i1 to i32
    %c0_i32_26 = arith.constant 0 : i32
    %41 = arith.cmpi ne, %40, %c0_i32_26 : i32
    scf.if %41 {
      %c0_27 = arith.constant 0 : index
      %c0_28 = arith.constant 0 : index
      %42 = vector.load %arg9[%c0_27, %c0_28] : memref<32x1xf32, #tpu.memory_space<vmem>>, vector<32x1xf32>
      %c0_29 = arith.constant 0 : index
      %c0_30 = arith.constant 0 : index
      %43 = vector.load %arg10[%c0_29, %c0_30] : memref<32x1xf32, #tpu.memory_space<vmem>>, vector<32x1xf32>
      %44 = math.log %43 : vector<32x1xf32>
      %45 = arith.addf %42, %44 : vector<32x1xf32>
      %c0_31 = arith.constant 0 : index
      %c0_32 = arith.constant 0 : index
      %46 = vector.load %arg5[%c0_31, %c0_32] : memref<32x1xi32, #tpu.memory_space<vmem>>, vector<32x1xi32>
      %c0_i32_33 = arith.constant 0 : i32
      %47 = vector.broadcast %c0_i32_33 : i32 to vector<32x1xi32>
      %48 = arith.cmpi sge, %46, %47 : vector<32x1xi32>
      %49 = arith.extui %48 : vector<32x1xi1> to vector<32x1xi32>
      %50 = arith.sitofp %49 : vector<32x1xi32> to vector<32x1xf32>
      %c0_34 = arith.constant 0 : index
      %c0_35 = arith.constant 0 : index
      %51 = vector.load %arg11[%c0_34, %c0_35] : memref<32x1xf32, #tpu.memory_space<vmem>>, vector<32x1xf32>
      %52 = arith.subf %45, %51 : vector<32x1xf32>
      %53 = arith.mulf %50, %52 : vector<32x1xf32>
      %54 = vector.shape_cast %53 : vector<32x1xf32> to vector<1x32x1xf32>
      %cst_36 = arith.constant dense<0.000000e+00> : vector<1xf32>
      %55 = vector.multi_reduction <add>, %54, %cst_36 [1, 2] : vector<1x32x1xf32> to vector<1xf32>
      %56 = vector.shape_cast %55 : vector<1xf32> to vector<1x1x1xf32>
      %57 = vector.extract %56[0, 0, 0] : f32 from vector<1x1x1xf32>
      %58 = vector.broadcast %57 : f32 to vector<8x128xf32>
      %c0_37 = arith.constant 0 : index
      %c0_38 = arith.constant 0 : index
      %59 = vector.load %arg8[%c0_37, %c0_38] : memref<8x128xf32, #tpu.memory_space<vmem>>, vector<8x128xf32>
      tpu.vector_store %arg8[%c0_37, %c0_38], %58 {strides = array<i32>} : memref<8x128xf32, #tpu.memory_space<vmem>>, vector<8x128xf32>,
    } else {
    }
    return
  }
  func.func @transform_0(%arg0: i32, %arg1: i32) -> (i32, i32) {
    %c0_i32 = arith.constant 0 : i32
    %c0_i32_0 = arith.constant 0 : i32
    return %arg0, %c0_i32 : i32, i32
  }
  func.func @transform_1(%arg0: i32, %arg1: i32) -> (i32, i32) {
    %c0_i32 = arith.constant 0 : i32
    %c0_i32_0 = arith.constant 0 : i32
    %c0_i32_1 = arith.constant 0 : i32
    return %c0_i32, %c0_i32_0 : i32, i32
  }
  func.func @transform_2(%arg0: i32, %arg1: i32) -> (i32, i32) {
    %c0_i32 = arith.constant 0 : i32
    %c0_i32_0 = arith.constant 0 : i32
    return %c0_i32, %arg1 : i32, i32
  }
  func.func @transform_3(%arg0: i32, %arg1: i32) -> (i32, i32) {
    %c0_i32 = arith.constant 0 : i32
    %c0_i32_0 = arith.constant 0 : i32
    return %arg0, %c0_i32 : i32, i32
  }
  func.func @transform_4(%arg0: i32, %arg1: i32) -> (i32, i32) {
    %c0_i32 = arith.constant 0 : i32
    %c0_i32_0 = arith.constant 0 : i32
    return %arg0, %c0_i32 : i32, i32
  }
  func.func @transform_5(%arg0: i32, %arg1: i32) -> (i32, i32) {
    %c0_i32 = arith.constant 0 : i32
    return %arg0, %arg1 : i32, i32
  }
  func.func @transform_6(%arg0: i32, %arg1: i32) -> (i32, i32) {
    %c0_i32 = arith.constant 0 : i32
    %c0_i32_0 = arith.constant 0 : i32
    return %arg0, %c0_i32 : i32, i32
  }
}

module attributes {stable_mosaic.version = 11 : i64} {
  func.func @fused_lm_ce_kernel(%arg0: i32, %arg1: i32, %arg2: memref<32x128xbf16, #tpu.memory_space<vmem>>, %arg3: memref<128x128xbf16, #tpu.memory_space<vmem>>, %arg4: memref<128x256xbf16, #tpu.memory_space<vmem>>, %arg5: memref<32x1xi32, #tpu.memory_space<vmem>>, %arg6: memref<32x128xbf16, #tpu.memory_space<vmem>>, %arg7: memref<32x256xbf16, #tpu.memory_space<vmem>>, %arg8: memref<8x128xf32, #tpu.memory_space<vmem>>, %arg9: memref<32x1xf32, #tpu.memory_space<vmem>>, %arg10: memref<32x1xf32, #tpu.memory_space<vmem>>, %arg11: memref<32x1xf32, #tpu.memory_space<vmem>>) attributes {dimension_semantics = [#tpu.dimension_semantics<parallel>, #tpu.dimension_semantics<arbitrary>], iteration_bounds = array<i64: 2, 2>, scalar_prefetch = 0 : i64, scratch_operands = 3 : i64, tpu.core_type = #tpu.core_type<tc>, window_params = [{transform_indices = @transform_0, window_bounds = array<i64: 32, 128>}, {pipeline_mode = #tpu.pipeline_mode<synchronous>, transform_indices = @transform_1, window_bounds = array<i64: 128, 128>}, {transform_indices = @transform_2, window_bounds = array<i64: 128, 256>}, {transform_indices = @transform_3, window_bounds = array<i64: 32, 1>}, {transform_indices = @transform_4, window_bounds = array<i64: 32, 128>}, {transform_indices = @transform_5, window_bounds = array<i64: 32, 256>}, {transform_indices = @transform_6, window_bounds = array<i64: 8, 128>}]} {
    %c0_i32 = arith.constant 0 : i32
    %0 = arith.cmpi eq, %arg1, %c0_i32 : i32
    %1 = arith.extui %0 : i1 to i32
    %c0_i32_0 = arith.constant 0 : i32
    %2 = arith.cmpi ne, %1, %c0_i32_0 : i32
    scf.if %2 {
      %c0_27 = arith.constant 0 : index
      %c0_28 = arith.constant 0 : index
      %42 = vector.load %arg2[%c0_27, %c0_28] : memref<32x128xbf16, #tpu.memory_space<vmem>>, vector<32x128xbf16>
      %c0_29 = arith.constant 0 : index
      %c0_30 = arith.constant 0 : index
      %43 = vector.load %arg3[%c0_29, %c0_30] : memref<128x128xbf16, #tpu.memory_space<vmem>>, vector<128x128xbf16>
      %cst_31 = arith.constant dense<0.000000e+00> : vector<32x128xf32>
      %44 = tpu.matmul %42, %43, %cst_31 {dimension_numbers = #tpu.dot_dimension_numbers<[1], [0], [0], [1], [0, 0, 1, 1], [], []>} : vector<32x128xbf16>, vector<128x128xbf16>, vector<32x128xf32> -> vector<32x128xf32>
      %45 = math.tanh %44 : vector<32x128xf32>
      %46 = arith.truncf %45 : vector<32x128xf32> to vector<32x128xbf16>
      %c0_32 = arith.constant 0 : index
      %c0_33 = arith.constant 0 : index
      %47 = vector.load %arg6[%c0_32, %c0_33] : memref<32x128xbf16, #tpu.memory_space<vmem>>, vector<32x128xbf16>
      tpu.vector_store %arg6[%c0_32, %c0_33], %46 {strides = array<i32>} : memref<32x128xbf16, #tpu.memory_space<vmem>>, vector<32x128xbf16>,
      %cst_34 = arith.constant 0xFF800000 : f32
      %48 = vector.broadcast %cst_34 : f32 to vector<32x1xf32>
      %c0_35 = arith.constant 0 : index
      %c0_36 = arith.constant 0 : index
      %49 = vector.load %arg9[%c0_35, %c0_36] : memref<32x1xf32, #tpu.memory_space<vmem>>, vector<32x1xf32>
      tpu.vector_store %arg9[%c0_35, %c0_36], %48 {strides = array<i32>} : memref<32x1xf32, #tpu.memory_space<vmem>>, vector<32x1xf32>,
      %cst_37 = arith.constant 0.000000e+00 : f32
      %50 = vector.broadcast %cst_37 : f32 to vector<32x1xf32>
      %c0_38 = arith.constant 0 : index
      %c0_39 = arith.constant 0 : index
      %51 = vector.load %arg10[%c0_38, %c0_39] : memref<32x1xf32, #tpu.memory_space<vmem>>, vector<32x1xf32>
      tpu.vector_store %arg10[%c0_38, %c0_39], %50 {strides = array<i32>} : memref<32x1xf32, #tpu.memory_space<vmem>>, vector<32x1xf32>,
      %cst_40 = arith.constant 0.000000e+00 : f32
      %52 = vector.broadcast %cst_40 : f32 to vector<32x1xf32>
      %c0_41 = arith.constant 0 : index
      %c0_42 = arith.constant 0 : index
      %53 = vector.load %arg11[%c0_41, %c0_42] : memref<32x1xf32, #tpu.memory_space<vmem>>, vector<32x1xf32>
      tpu.vector_store %arg11[%c0_41, %c0_42], %52 {strides = array<i32>} : memref<32x1xf32, #tpu.memory_space<vmem>>, vector<32x1xf32>,
    } else {
    }
    %c0 = arith.constant 0 : index
    %c0_1 = arith.constant 0 : index
    %3 = vector.load %arg6[%c0, %c0_1] : memref<32x128xbf16, #tpu.memory_space<vmem>>, vector<32x128xbf16>
    %c0_2 = arith.constant 0 : index
    %c0_3 = arith.constant 0 : index
    %4 = vector.load %arg4[%c0_2, %c0_3] : memref<128x256xbf16, #tpu.memory_space<vmem>>, vector<128x256xbf16>
    %cst = arith.constant dense<0.000000e+00> : vector<32x256xf32>
    %5 = tpu.matmul %3, %4, %cst {dimension_numbers = #tpu.dot_dimension_numbers<[1], [0], [0], [1], [0, 0, 1, 1], [], []>} : vector<32x128xbf16>, vector<128x256xbf16>, vector<32x256xf32> -> vector<32x256xf32>
    %6 = arith.truncf %5 : vector<32x256xf32> to vector<32x256xbf16>
    %c0_4 = arith.constant 0 : index
    %c0_5 = arith.constant 0 : index
    %7 = vector.load %arg7[%c0_4, %c0_5] : memref<32x256xbf16, #tpu.memory_space<vmem>>, vector<32x256xbf16>
    tpu.vector_store %arg7[%c0_4, %c0_5], %6 {strides = array<i32>} : memref<32x256xbf16, #tpu.memory_space<vmem>>, vector<32x256xbf16>,
    %c0_6 = arith.constant 0 : index
    %c0_7 = arith.constant 0 : index
    %8 = vector.load %arg5[%c0_6, %c0_7] : memref<32x1xi32, #tpu.memory_space<vmem>>, vector<32x1xi32>
    %c256_i32 = arith.constant 256 : i32
    %9 = arith.muli %arg1, %c256_i32 : i32
    %10 = vector.broadcast %9 : i32 to vector<32x1xi32>
    %11 = arith.subi %8, %10 : vector<32x1xi32>
    %12 = tpu.iota {dimensions = array<i32: 1>} : vector<32x256xi32>
    %c0_8 = arith.constant 0 : index
    %c0_9 = arith.constant 0 : index
    %13 = vector.load %arg11[%c0_8, %c0_9] : memref<32x1xf32, #tpu.memory_space<vmem>>, vector<32x1xf32>
    %14 = vector.broadcast %11 : vector<32x1xi32> to vector<32x256xi32>
    %15 = arith.cmpi eq, %12, %14 : vector<32x256xi32>
    %cst_10 = arith.constant 0.000000e+00 : f32
    %16 = vector.broadcast %cst_10 : f32 to vector<32x256xf32>
    %17 = arith.select %15, %5, %16 : vector<32x256xi1>, vector<32x256xf32>
    %cst_11 = arith.constant dense<0.000000e+00> : vector<32xf32>
    %18 = vector.multi_reduction <add>, %17, %cst_11 [1] : vector<32x256xf32> to vector<32xf32>
    %19 = vector.shape_cast %18 : vector<32xf32> to vector<32x1xf32>
    %20 = arith.addf %13, %19 : vector<32x1xf32>
    %c0_12 = arith.constant 0 : index
    %c0_13 = arith.constant 0 : index
    %21 = vector.load %arg11[%c0_12, %c0_13] : memref<32x1xf32, #tpu.memory_space<vmem>>, vector<32x1xf32>
    tpu.vector_store %arg11[%c0_12, %c0_13], %20 {strides = array<i32>} : memref<32x1xf32, #tpu.memory_space<vmem>>, vector<32x1xf32>,
    %c0_14 = arith.constant 0 : index
    %c0_15 = arith.constant 0 : index
    %22 = vector.load %arg9[%c0_14, %c0_15] : memref<32x1xf32, #tpu.memory_space<vmem>>, vector<32x1xf32>
    %cst_16 = arith.constant dense<0xFF800000> : vector<32xf32>
    %23 = vector.multi_reduction <maximumf>, %5, %cst_16 [1] : vector<32x256xf32> to vector<32xf32>
    %24 = vector.shape_cast %23 : vector<32xf32> to vector<32x1xf32>
    %25 = arith.maximumf %22, %24 : vector<32x1xf32>
    %c0_17 = arith.constant 0 : index
    %c0_18 = arith.constant 0 : index
    %26 = vector.load %arg10[%c0_17, %c0_18] : memref<32x1xf32, #tpu.memory_space<vmem>>, vector<32x1xf32>
    %c0_19 = arith.constant 0 : index
    %c0_20 = arith.constant 0 : index
    %27 = vector.load %arg9[%c0_19, %c0_20] : memref<32x1xf32, #tpu.memory_space<vmem>>, vector<32x1xf32>
    %28 = arith.subf %27, %25 : vector<32x1xf32>
    %29 = math.exp %28 : vector<32x1xf32>
    %30 = arith.mulf %26, %29 : vector<32x1xf32>
    %31 = vector.broadcast %25 : vector<32x1xf32> to vector<32x256xf32>
    %32 = arith.subf %5, %31 : vector<32x256xf32>
    %33 = math.exp %32 : vector<32x256xf32>
    %cst_21 = arith.constant dense<0.000000e+00> : vector<32xf32>
    %34 = vector.multi_reduction <add>, %33, %cst_21 [1] : vector<32x256xf32> to vector<32xf32>
    %35 = vector.shape_cast %34 : vector<32xf32> to vector<32x1xf32>
    %36 = arith.addf %30, %35 : vector<32x1xf32>
    %c0_22 = arith.constant 0 : index
    %c0_23 = arith.constant 0 : index
    %37 = vector.load %arg10[%c0_22, %c0_23] : memref<32x1xf32, #tpu.memory_space<vmem>>, vector<32x1xf32>
    tpu.vector_store %arg10[%c0_22, %c0_23], %36 {strides = array<i32>} : memref<32x1xf32, #tpu.memory_space<vmem>>, vector<32x1xf32>,
    %c0_24 = arith.constant 0 : index
    %c0_25 = arith.constant 0 : index
    %38 = vector.load %arg9[%c0_24, %c0_25] : memref<32x1xf32, #tpu.memory_space<vmem>>, vector<32x1xf32>
    tpu.vector_store %arg9[%c0_24, %c0_25], %25 {strides = array<i32>} : memref<32x1xf32, #tpu.memory_space<vmem>>, vector<32x1xf32>,
    %c1_i32 = arith.constant 1 : i32
    %39 = arith.cmpi eq, %arg1, %c1_i32 : i32
    %40 = arith.extui %39 : i1 to i32
    %c0_i32_26 = arith.constant 0 : i32
    %41 = arith.cmpi ne, %40, %c0_i32_26 : i32
    scf.if %41 {
      %c0_27 = arith.constant 0 : index
      %c0_28 = arith.constant 0 : index
      %42 = vector.load %arg9[%c0_27, %c0_28] : memref<32x1xf32, #tpu.memory_space<vmem>>, vector<32x1xf32>
      %c0_29 = arith.constant 0 : index
      %c0_30 = arith.constant 0 : index
      %43 = vector.load %arg10[%c0_29, %c0_30] : memref<32x1xf32, #tpu.memory_space<vmem>>, vector<32x1xf32>
      %44 = math.log %43 : vector<32x1xf32>
      %45 = arith.addf %42, %44 : vector<32x1xf32>
      %c0_31 = arith.constant 0 : index
      %c0_32 = arith.constant 0 : index
      %46 = vector.load %arg5[%c0_31, %c0_32] : memref<32x1xi32, #tpu.memory_space<vmem>>, vector<32x1xi32>
      %c0_i32_33 = arith.constant 0 : i32
      %47 = vector.broadcast %c0_i32_33 : i32 to vector<32x1xi32>
      %48 = arith.cmpi sge, %46, %47 : vector<32x1xi32>
      %49 = arith.extui %48 : vector<32x1xi1> to vector<32x1xi32>
      %50 = arith.sitofp %49 : vector<32x1xi32> to vector<32x1xf32>
      %c0_34 = arith.constant 0 : index
      %c0_35 = arith.constant 0 : index
      %51 = vector.load %arg11[%c0_34, %c0_35] : memref<32x1xf32, #tpu.memory_space<vmem>>, vector<32x1xf32>
      %52 = arith.subf %45, %51 : vector<32x1xf32>
      %53 = arith.mulf %50, %52 : vector<32x1xf32>
      %54 = vector.shape_cast %53 : vector<32x1xf32> to vector<1x32x1xf32>
      %cst_36 = arith.constant dense<0.000000e+00> : vector<1xf32>
      %55 = vector.multi_reduction <add>, %54, %cst_36 [1, 2] : vector<1x32x1xf32> to vector<1xf32>
      %56 = vector.shape_cast %55 : vector<1xf32> to vector<1x1x1xf32>
      %57 = vector.extract %56[0, 0, 0] : f32 from vector<1x1x1xf32>
      %58 = vector.broadcast %57 : f32 to vector<8x128xf32>
      %c0_37 = arith.constant 0 : index
      %c0_38 = arith.constant 0 : index
      %59 = vector.load %arg8[%c0_37, %c0_38] : memref<8x128xf32, #tpu.memory_space<vmem>>, vector<8x128xf32>
      tpu.vector_store %arg8[%c0_37, %c0_38], %58 {strides = array<i32>} : memref<8x128xf32, #tpu.memory_space<vmem>>, vector<8x128xf32>,
    } else {
    }
    return
  }
  func.func @transform_0(%arg0: i32, %arg1: i32) -> (i32, i32) {
    %c0_i32 = arith.constant 0 : i32
    %c0_i32_0 = arith.constant 0 : i32
    return %arg0, %c0_i32 : i32, i32
  }
  func.func @transform_1(%arg0: i32, %arg1: i32) -> (i32, i32) {
    %c0_i32 = arith.constant 0 : i32
    %c0_i32_0 = arith.constant 0 : i32
    %c0_i32_1 = arith.constant 0 : i32
    return %c0_i32, %c0_i32_0 : i32, i32
  }
  func.func @transform_2(%arg0: i32, %arg1: i32) -> (i32, i32) {
    %c0_i32 = arith.constant 0 : i32
    %c0_i32_0 = arith.constant 0 : i32
    return %c0_i32, %arg1 : i32, i32
  }
  func.func @transform_3(%arg0: i32, %arg1: i32) -> (i32, i32) {
    %c0_i32 = arith.constant 0 : i32
    %c0_i32_0 = arith.constant 0 : i32
    return %arg0, %c0_i32 : i32, i32
  }
  func.func @transform_4(%arg0: i32, %arg1: i32) -> (i32, i32) {
    %c0_i32 = arith.constant 0 : i32
    %c0_i32_0 = arith.constant 0 : i32
    return %arg0, %c0_i32 : i32, i32
  }
  func.func @transform_5(%arg0: i32, %arg1: i32) -> (i32, i32) {
    %c0_i32 = arith.constant 0 : i32
    return %arg0, %arg1 : i32, i32
  }
  func.func @transform_6(%arg0: i32, %arg1: i32) -> (i32, i32) {
    %c0_i32 = arith.constant 0 : i32
    %c0_i32_0 = arith.constant 0 : i32
    return %arg0, %c0_i32 : i32, i32
  }
}

</mosaic_0001>

<llo_original>
// kernel: tpu_custom_call.1
$region0: #{tpu_custom_call.1}
  #allocation0 [shape = 'u32[]', space=smem, size = 0x4, offset = 0x4, fixed_abs, tag = 'smem constant byte address 0x4 - core index']
  #allocation1 [shape = 'u32[144,128]{1,0:T(1,128)}', space=vmem, size = 0x12000, scoped, tag = 'internal scratch']
  #allocation2 [shape = 'f32[32,1]{1,0:T(8,128)}', space=vmem, size = 0x4000, scoped, tag = 'scratch operand']
  #allocation3 [shape = 'f32[32,1]{1,0:T(8,128)}', space=vmem, size = 0x4000, scoped, tag = 'scratch operand']
  #allocation4 [shape = 'f32[32,1]{1,0:T(8,128)}', space=vmem, size = 0x4000, scoped, tag = 'scratch operand']
  %s0 = inlined_call_operand.hbm [shape: bf16[64,128], index: 0, kind: input, shape index: {}]
  %s1 = inlined_call_operand.vmem [shape: bf16[128,128], index: 1, kind: input, shape index: {}]
  %s2 = inlined_call_operand.hbm [shape: bf16[128,512], index: 2, kind: input, shape index: {}]
  %s3 = inlined_call_operand.vmem [shape: s32[64,1], index: 3, kind: input, shape index: {}]
  %s4 = inlined_call_operand.hbm [shape: bf16[64,128], index: 4, kind: output, shape index: {0}]
  %s5 = inlined_call_operand.hbm [shape: bf16[64,512], index: 5, kind: output, shape index: {1}]
  %s6 = inlined_call_operand.hbm [shape: f32[16,128], index: 6, kind: output, shape index: {2}]
  %7 = xla_tuple %s4, %s5, %s6
  %s8 = sld [smem:[#allocation0]]
  $region81: #{tpu_custom_call.1} parent=0
    _
  %s10 = ssub.s32 1, %s8
  %s11 = scalar_select 0, %s10, %s8
  $region1: #{tpu_custom_call.1} parent=0
    #allocation5 [shape = 'u8[16384]{0}', space=vmem, size = 0x4000, scoped, tag = 'input window, operand 0']
    #allocation6 [shape = 's32[2]{0}', space=sflag, size = 0x8, scoped, tag = 'scoped memory for tpu_custom_call.1']
    #allocation7 [shape = 's32[2]{0}', space=sflag, size = 0x8, scoped, tag = 'scoped memory for tpu_custom_call.1']
    #allocation8 [shape = 'u8[131072]{0}', space=vmem, size = 0x20000, scoped, tag = 'input window, operand 2']
    #allocation9 [shape = 's32[2]{0}', space=sflag, size = 0x8, scoped, tag = 'scoped memory for tpu_custom_call.1']
    #allocation10 [shape = 'u8[16384]{0}', space=vmem, size = 0x4000, scoped, tag = 'output window, operand 0']
    #allocation11 [shape = 'u8[32768]{0}', space=vmem, size = 0x8000, scoped, tag = 'output window, operand 1']
    #allocation12 [shape = 's32[2]{0}', space=sflag, size = 0x8, scoped, tag = 'scoped memory for tpu_custom_call.1']
    #allocation13 [shape = 'u8[8192]{0}', space=vmem, size = 0x2000, scoped, tag = 'output window, operand 2']
    %12 = vsyncpa [#allocation6], 0
    %s13 = scalar_lea.sflag [#allocation6], 1
    %14 = vsyncpa %s13, 0
    %15 = vsyncpa [#allocation9], 0
    %s16 = scalar_lea.sflag [#allocation9], 1
    %17 = vsyncpa %s16, 0
    %18 = vsyncpa [#allocation7], 0
    %s19 = scalar_lea.sflag [#allocation7], 1
    %20 = vsyncpa %s19, 0
    %21 = vsyncpa [#allocation12], 0
    %s22 = scalar_lea.sflag [#allocation12], 1
    %23 = vsyncpa %s22, 0
    loop: start=0, step=1, limit=6
    $region2: #{tpu_custom_call.1} parent=1 // loop_pre_header
      _
    $region3: #{tpu_custom_call.1} parent=1 // loop_header
      %s25 = sphi 0, %s29
      %p26 = scmp.ge.s32.totalorder %s25, 6
      %s32 = sphi 0, %s44
      %s33 = sphi 0, %s40
      %s34 = sphi 0, %s32
      %s35 = sphi 0, %s33
      %s36 = sphi 0, %s34
      %s37 = sphi 0, %s35
      %s47 = sphi 0, %s49
      %s50 = sphi 0, %s47
      %s51 = sphi 0, %s50
      %s67 = sphi 0, %s51
      %s71 = sphi 0, %s71
      %s73 = sphi 0, %s71
      %s74 = sphi 0, %s73
      %s88 = sphi 0, %s74
      %s94 = sphi 0, %s96
      %s97 = sphi 0, %s94
      %s98 = sphi 0, %s97
      %s114 = sphi 0, %s98
      %s120 = sphi 0, %s122
      %s123 = sphi 0, %s120
      %s124 = sphi 0, %s123
      %s140 = sphi 0, %s124
      %s146 = sphi 0, %s148
      %s149 = sphi 0, %s146
      %s150 = sphi 0, %s149
      %s166 = sphi 0, %s150
      %s174 = sphi 0, %s176
      %s177 = sphi 0, %s174
      %s178 = sphi 0, %s177
      %s194 = sphi 0, %s178
      %s200 = sphi 0, %s202
      %s203 = sphi 0, %s200
      %s204 = sphi 0, %s203
      %s220 = sphi 0, %s204
    $region4: #{tpu_custom_call.1} parent=1 // loop_header_branch
      %28 = sbr.rel (%p26) target = $region8
    $region5: #{tpu_custom_call.1} parent=1 // loop_body
      %s30 = ssub.s32 %s25, 1
      %s31 = ssub.s32 %s25, 2
      %s38 = sadd.s32 1, %s33
      %p39 = scmp.ge.s32.totalorder %s38, 2
      %s40 = scalar_select %p39, 0, %s38
      %s41 = sadd.s32 1, %s32
      %s42 = scalar_select %p39, %s41, %s32
      %p43 = scmp.ge.s32.totalorder %s42, 2
      %s44 = scalar_select %p43, 0, %s42
      %s45 = ssub.s32 %s32, %s44
      %p46 = scmp.eq.s32.totalorder %s45, 0
      %s48 = sadd.s32 %s47, 1
      %s49 = scalar_select %p46, %s47, %s48
      %p52 = pneg %p46
      %p53 = scmp.eq.s32.totalorder %s25, 3
      %p54 = por %p52, %p53
      %p55 = scmp.ne.s32.totalorder %s47, %s50
      %p56 = scmp.eq.s32.totalorder %s25, 0
      %p57 = por %p55, %p56
      %p58 = scmp.ne.s32.totalorder %s47, %s50
      %p59 = scmp.eq.s32.totalorder %s30, 3
      %p60 = por %p58, %p59
      %p61 = scmp.ne.s32.totalorder %s50, %s51
      %p62 = scmp.eq.s32.totalorder %s30, 0
      %p63 = por %p61, %p62
      %p64 = scmp.ne.s32.totalorder %s50, %s51
      %p65 = scmp.eq.s32.totalorder %s31, 3
      %p66 = por %p64, %p65
      %p68 = scmp.ne.s32.totalorder %s51, %s67
      %p69 = scmp.eq.s32.totalorder %s31, 0
      %p70 = por %p68, %p69
      %s72 = sadd.s32 %s71, 1
      %p75 = scmp.eq.s32.totalorder %s25, 3
      %p76 = scmp.ne.s32.totalorder %s71, %s73
      %p77 = scmp.eq.s32.totalorder %s25, 0
      %p78 = por %p76, %p77
      %p79 = scmp.ne.s32.totalorder %s71, %s73
      %p80 = scmp.eq.s32.totalorder %s30, 3
      %p81 = por %p79, %p80
      %p82 = scmp.ne.s32.totalorder %s73, %s74
      %p83 = scmp.eq.s32.totalorder %s30, 0
      %p84 = por %p82, %p83
      %p85 = scmp.ne.s32.totalorder %s73, %s74
      %p86 = scmp.eq.s32.totalorder %s31, 3
      %p87 = por %p85, %p86
      %p89 = scmp.ne.s32.totalorder %s74, %s88
      %p90 = scmp.eq.s32.totalorder %s31, 0
      %p91 = por %p89, %p90
      %s92 = ssub.s32 %s33, %s40
      %p93 = scmp.eq.s32.totalorder %s92, 0
      %s95 = sadd.s32 %s94, 1
      %s96 = scalar_select %p93, %s94, %s95
      %p99 = pneg %p93
      %p100 = scmp.eq.s32.totalorder %s25, 3
      %p101 = por %p99, %p100
      %p102 = scmp.ne.s32.totalorder %s94, %s97
      %p103 = scmp.eq.s32.totalorder %s25, 0
      %p104 = por %p102, %p103
      %p105 = scmp.ne.s32.totalorder %s94, %s97
      %p106 = scmp.eq.s32.totalorder %s30, 3
      %p107 = por %p105, %p106
      %p108 = scmp.ne.s32.totalorder %s97, %s98
      %p109 = scmp.eq.s32.totalorder %s30, 0
      %p110 = por %p108, %p109
      %p111 = scmp.ne.s32.totalorder %s97, %s98
      %p112 = scmp.eq.s32.totalorder %s31, 3
      %p113 = por %p111, %p112
      %p115 = scmp.ne.s32.totalorder %s98, %s114
      %p116 = scmp.eq.s32.totalorder %s31, 0
      %p117 = por %p115, %p116
      %s118 = ssub.s32 %s32, %s44
      %p119 = scmp.eq.s32.totalorder %s118, 0
      %s121 = sadd.s32 %s120, 1
      %s122 = scalar_select %p119, %s120, %s121
      %p125 = pneg %p119
      %p126 = scmp.eq.s32.totalorder %s25, 3
      %p127 = por %p125, %p126
      %p128 = scmp.ne.s32.totalorder %s120, %s123
      %p129 = scmp.eq.s32.totalorder %s25, 0
      %p130 = por %p128, %p129
      %p131 = scmp.ne.s32.totalorder %s120, %s123
      %p132 = scmp.eq.s32.totalorder %s30, 3
      %p133 = por %p131, %p132
      %p134 = scmp.ne.s32.totalorder %s123, %s124
      %p135 = scmp.eq.s32.totalorder %s30, 0
      %p136 = por %p134, %p135
      %p137 = scmp.ne.s32.totalorder %s123, %s124
      %p138 = scmp.eq.s32.totalorder %s31, 3
      %p139 = por %p137, %p138
      %p141 = scmp.ne.s32.totalorder %s124, %s140
      %p142 = scmp.eq.s32.totalorder %s31, 0
      %p143 = por %p141, %p142
      %s144 = ssub.s32 %s32, %s44
      %p145 = scmp.eq.s32.totalorder %s144, 0
      %s147 = sadd.s32 %s146, 1
      %s148 = scalar_select %p145, %s146, %s147
      %p151 = pneg %p145
      %p152 = scmp.eq.s32.totalorder %s25, 3
      %p153 = por %p151, %p152
      %p154 = scmp.ne.s32.totalorder %s146, %s149
      %p155 = scmp.eq.s32.totalorder %s25, 0
      %p156 = por %p154, %p155
      %p157 = scmp.ne.s32.totalorder %s146, %s149
      %p158 = scmp.eq.s32.totalorder %s30, 3
      %p159 = por %p157, %p158
      %p160 = scmp.ne.s32.totalorder %s149, %s150
      %p161 = scmp.eq.s32.totalorder %s30, 0
      %p162 = por %p160, %p161
      %p163 = scmp.ne.s32.totalorder %s149, %s150
      %p164 = scmp.eq.s32.totalorder %s31, 3
      %p165 = por %p163, %p164
      %p167 = scmp.ne.s32.totalorder %s150, %s166
      %p168 = scmp.eq.s32.totalorder %s31, 0
      %p169 = por %p167, %p168
      %s170 = ssub.s32 %s32, %s44
      %s171 = ssub.s32 %s33, %s40
      %s172 = sor.u32 %s170, %s171
      %p173 = scmp.eq.s32.totalorder %s172, 0
      %s175 = sadd.s32 %s174, 1
      %s176 = scalar_select %p173, %s174, %s175
      %p179 = pneg %p173
      %p180 = scmp.eq.s32.totalorder %s25, 3
      %p181 = por %p179, %p180
      %p182 = scmp.ne.s32.totalorder %s174, %s177
      %p183 = scmp.eq.s32.totalorder %s25, 0
      %p184 = por %p182, %p183
      %p185 = scmp.ne.s32.totalorder %s174, %s177
      %p186 = scmp.eq.s32.totalorder %s30, 3
      %p187 = por %p185, %p186
      %p188 = scmp.ne.s32.totalorder %s177, %s178
      %p189 = scmp.eq.s32.totalorder %s30, 0
      %p190 = por %p188, %p189
      %p191 = scmp.ne.s32.totalorder %s177, %s178
      %p192 = scmp.eq.s32.totalorder %s31, 3
      %p193 = por %p191, %p192
      %p195 = scmp.ne.s32.totalorder %s178, %s194
      %p196 = scmp.eq.s32.totalorder %s31, 0
      %p197 = por %p195, %p196
      %s198 = ssub.s32 %s32, %s44
      %p199 = scmp.eq.s32.totalorder %s198, 0
      %s201 = sadd.s32 %s200, 1
      %s202 = scalar_select %p199, %s200, %s201
      %p205 = pneg %p199
      %p206 = scmp.eq.s32.totalorder %s25, 3
      %p207 = por %p205, %p206
      %p208 = scmp.ne.s32.totalorder %s200, %s203
      %p209 = scmp.eq.s32.totalorder %s25, 0
      %p210 = por %p208, %p209
      %p211 = scmp.ne.s32.totalorder %s200, %s203
      %p212 = scmp.eq.s32.totalorder %s30, 3
      %p213 = por %p211, %p212
      %p214 = scmp.ne.s32.totalorder %s203, %s204
      %p215 = scmp.eq.s32.totalorder %s30, 0
      %p216 = por %p214, %p215
      %p217 = scmp.ne.s32.totalorder %s203, %s204
      %p218 = scmp.eq.s32.totalorder %s31, 3
      %p219 = por %p217, %p218
      %p221 = scmp.ne.s32.totalorder %s204, %s220
      %p222 = scmp.eq.s32.totalorder %s31, 0
      %p223 = por %p221, %p222
      %p224 = scmp.le.s32.totalorder 1, %s25
      %p225 = scmp.lt.s32.totalorder %s25, 5
      %p226 = pnand %p224, %p225
      %p227 = pneg %p226
      // Predicated region
      $region9: #{tpu_custom_call.1} parent=5 // pred_check
        _
      $region10: #{tpu_custom_call.1} parent=5 // pred_check_branch
        %229 = sbr.rel (%p226) target = $region12
      $region11: #{tpu_custom_call.1} parent=5 // pred_region
        %s230 = ssub.s32 %s25, 1
        // Predicated region
        $region13: #{tpu_custom_call.1} parent=11 // pred_check
          %p231 = pneg %p84
        $region14: #{tpu_custom_call.1} parent=11 // pred_check_branch
          %233 = sbr.rel (%p231) target = $region16
        $region15: #{tpu_custom_call.1} parent=11 // pred_region
          _
        $region16: #{tpu_custom_call.1} parent=11 // pred_fallthru
          _
      $region12: #{tpu_custom_call.1} parent=5 // pred_fallthru
        _
      %p234 = scmp.lt.s32.totalorder %s25, 4
      // Predicated region
      $region17: #{tpu_custom_call.1} parent=5 // pred_check
        %p235 = pneg %p234
      $region18: #{tpu_custom_call.1} parent=5 // pred_check_branch
        %237 = sbr.rel (%p235) target = $region20
      $region19: #{tpu_custom_call.1} parent=5 // pred_region
        // Predicated region
        $region21: #{tpu_custom_call.1} parent=19 // pred_check
          %p238 = pneg %p57
        $region22: #{tpu_custom_call.1} parent=19 // pred_check_branch
          %240 = sbr.rel (%p238) target = $region24
        $region23: #{tpu_custom_call.1} parent=19 // pred_region
          %s241 = sand.u32 %s47, 1
          %s242 = scalar_lea.sflag [#allocation6], %s241
          %s243 = sand.u32 %s47, 1
          %s244 = smul.addr %s243, 16
          %s245 = scalar_lea.vmem [#allocation5], %s244
          %s246 = smul.u32 4, %s32
          %s248 = ssub.s32 256, 256
          %249 = vsyncadd %s242, %s248
          %s250 = smul.addr %s246, 64
          %s251 = scalar_lea.hbm %s0, %s250
          %s252 = sshll.u32 %s245, 4
          %s253 = int_to_ptr.vmem [resolvable:$true] %s252
          %258 = dma.hbm_to_vmem [thread:$0]  %s251, 256, %s253, %s242, 64, 64, 4
        $region24: #{tpu_custom_call.1} parent=19 // pred_fallthru
          _
        // Predicated region
        $region25: #{tpu_custom_call.1} parent=19 // pred_check
          %p259 = pneg %p104
        $region26: #{tpu_custom_call.1} parent=19 // pred_check_branch
          %261 = sbr.rel (%p259) target = $region28
        $region27: #{tpu_custom_call.1} parent=19 // pred_region
          %s262 = sand.u32 %s94, 1
          %s263 = scalar_lea.sflag [#allocation9], %s262
          %s264 = sand.u32 %s94, 1
          %s265 = smul.addr %s264, 128
          %s266 = scalar_lea.vmem [#allocation8], %s265
          %s267 = smul.u32 2, %s33
          %s269 = ssub.s32 2048, 2048
          %270 = vsyncadd %s263, %s269
          %s271 = smul.addr %s267, 64
          %s272 = scalar_lea.hbm %s2, %s271
          %s273 = sshll.u32 %s266, 4
          %s274 = int_to_ptr.vmem [resolvable:$true] %s273
          %279 = dma.hbm_to_vmem [thread:$0]  %s272, 2048, %s274, %s263, 256, 128, 8
        $region28: #{tpu_custom_call.1} parent=19 // pred_fallthru
          _
        // Predicated region
        $region29: #{tpu_custom_call.1} parent=19 // pred_check
          %p280 = pneg %p130
        $region30: #{tpu_custom_call.1} parent=19 // pred_check_branch
          %282 = sbr.rel (%p280) target = $region32
        $region31: #{tpu_custom_call.1} parent=19 // pred_region
          %s283 = smul.u32 4, %s32
          %p284 = scmp.lt.s32.totalorder %s283, 7
          %s285 = scalar_select %p284, %s283, 7
          %s286 = smul.addr %s285, 8
          %s287 = scalar_lea.vmem %s3, %s286
          %s288 = smul.u32 4, %s32
        $region32: #{tpu_custom_call.1} parent=19 // pred_fallthru
          _
      $region20: #{tpu_custom_call.1} parent=5 // pred_fallthru
        _
      %p289 = scmp.le.s32.totalorder 1, %s25
      %p290 = scmp.lt.s32.totalorder %s25, 5
      %p291 = pnand %p289, %p290
      %p292 = pneg %p291
      // Predicated region
      $region33: #{tpu_custom_call.1} parent=5 // pred_check
        _
      $region34: #{tpu_custom_call.1} parent=5 // pred_check_branch
        %294 = sbr.rel (%p291) target = $region36
      $region35: #{tpu_custom_call.1} parent=5 // pred_region
        %s295 = ssub.s32 %s25, 1
        %s296 = sand.u32 %s50, 1
        %s297 = scalar_lea.sflag [#allocation6], %s296
        %s298 = sand.u32 %s50, 1
        %s299 = smul.addr %s298, 16
        %s300 = scalar_lea.vmem [#allocation5], %s299
        // Predicated region
        $region37: #{tpu_custom_call.1} parent=35 // pred_check
          %p301 = pneg %p63
        $region38: #{tpu_custom_call.1} parent=35 // pred_check_branch
          %303 = sbr.rel (%p301) target = $region40
        $region39: #{tpu_custom_call.1} parent=35 // pred_region
          %304 = dma.done %s297, 256
        $region40: #{tpu_custom_call.1} parent=35 // pred_fallthru
          _
        %s305 = sand.u32 %s97, 1
        %s306 = scalar_lea.sflag [#allocation9], %s305
        %s307 = sand.u32 %s97, 1
        %s308 = smul.addr %s307, 128
        %s309 = scalar_lea.vmem [#allocation8], %s308
        // Predicated region
        $region41: #{tpu_custom_call.1} parent=35 // pred_check
          %p310 = pneg %p110
        $region42: #{tpu_custom_call.1} parent=35 // pred_check_branch
          %312 = sbr.rel (%p310) target = $region44
        $region43: #{tpu_custom_call.1} parent=35 // pred_region
          %313 = dma.done %s306, 2048
        $region44: #{tpu_custom_call.1} parent=35 // pred_fallthru
          _
        %s314 = sand.u32 %s50, 1
        %s315 = scalar_lea.sflag [#allocation6], %s314
        %s316 = sand.u32 %s50, 1
        %s317 = smul.addr %s316, 16
        %s318 = scalar_lea.vmem [#allocation5], %s317
        %p319 = pneg %p63
        %p320 = pneg %p60
        %p321 = pneg %p84
        %p322 = pneg %p81
        %s323 = sand.u32 %s97, 1
        %s324 = scalar_lea.sflag [#allocation9], %s323
        %s325 = sand.u32 %s97, 1
        %s326 = smul.addr %s325, 128
        %s327 = scalar_lea.vmem [#allocation8], %s326
        %p328 = pneg %p110
        %p329 = pneg %p107
        %s330 = smul.u32 4, %s34
        %p331 = scmp.lt.s32.totalorder %s330, 7
        %s332 = scalar_select %p331, %s330, 7
        %s333 = smul.addr %s332, 8
        %s334 = scalar_lea.vmem %s3, %s333
        %p335 = pneg %p136
        %p336 = pneg %p133
        %p337 = pneg %p162
        %p338 = pneg %p159
        %s339 = sand.u32 %s149, 1
        %s340 = scalar_lea.sflag [#allocation7], %s339
        %s341 = sand.u32 %s149, 1
        %s342 = smul.addr %s341, 16
        %s343 = scalar_lea.vmem [#allocation10], %s342
        %p344 = pneg %p190
        %p345 = pneg %p187
        %s346 = sand.u32 %s30, 1
        %s347 = scalar_lea.sflag [#allocation12], %s346
        %s348 = sand.u32 %s177, 1
        %s349 = smul.addr %s348, 32
        %s350 = scalar_lea.vmem [#allocation11], %s349
        %p351 = pneg %p216
        %p352 = pneg %p213
        %s353 = sand.u32 %s30, 1
        %s354 = scalar_lea.sflag [#allocation12], %s353
        %s355 = sand.u32 %s203, 1
        %s356 = smul.addr %s355, 8
        %s357 = scalar_lea.vmem [#allocation13], %s356
        %s358 = smul.u32 4, %s34
        %s359 = smul.u32 2, %s35
        %s360 = smul.u32 4, %s34
        %p361 = scmp.lt.s32.totalorder %s360, 7
        %s362 = scalar_select %p361, %s360, 7
        %s363 = smul.addr %s362, 8
        %s364 = scalar_lea.vmem %s3, %s363
        %s365 = smul.u32 4, %s34
        %s366 = smul.u32 4, %s34
        %s367 = smul.u32 4, %s34
        %s368 = smul.u32 2, %s35
        %p370 = scmp.eq.s32.totalorder %s35, 0
        // Predicated region
        $region45: #{tpu_custom_call.1} parent=35 // pred_check
          %p371 = pneg %p370
        $region46: #{tpu_custom_call.1} parent=35 // pred_check_branch
          %373 = sbr.rel (%p371) target = $region48
        $region47: #{tpu_custom_call.1} parent=35 // pred_region
          %v374 = vld [vmem:[%s300] sm:$0xf]
          %v375 = vld [vmem:[%s300 + $0x4] sm:$0xf]
          %v376 = vld [vmem:[%s300 + $0x8] sm:$0xf]
          %v377 = vld [vmem:[%s300 + $0xc] sm:$0xf]
          %v378 = vld [vmem:[%s1] sm:$0xf]
          %v379 = vld [vmem:[%s1 + $0x4] sm:$0xf]
          %v380 = vld [vmem:[%s1 + $0x8] sm:$0xf]
          %v381 = vld [vmem:[%s1 + $0xc] sm:$0xf]
          %v382 = vld [vmem:[%s1 + $0x10] sm:$0xf]
          %v383 = vld [vmem:[%s1 + $0x14] sm:$0xf]
          %v384 = vld [vmem:[%s1 + $0x18] sm:$0xf]
          %v385 = vld [vmem:[%s1 + $0x1c] sm:$0xf]
          %v386 = vld [vmem:[%s1 + $0x20] sm:$0xf]
          %v387 = vld [vmem:[%s1 + $0x24] sm:$0xf]
          %v388 = vld [vmem:[%s1 + $0x28] sm:$0xf]
          %v389 = vld [vmem:[%s1 + $0x2c] sm:$0xf]
          %v390 = vld [vmem:[%s1 + $0x30] sm:$0xf]
          %v391 = vld [vmem:[%s1 + $0x34] sm:$0xf]
          %v392 = vld [vmem:[%s1 + $0x38] sm:$0xf]
          %v393 = vld [vmem:[%s1 + $0x3c] sm:$0xf]
          %v398 = vunpack.c.l.b16 %v374
          %v399 = vunpack.c.l.b16 %v375
          %v400 = vunpack.c.l.b16 %v376
          %v401 = vunpack.c.l.b16 %v377
          %v402 = vpack.c.b16 %v399, %v398
          %v403 = vpack.c.b16 %v401, %v400
          %v422 = vunpack.c.l.b16 %v378
          %v423 = vunpack.c.l.b16 %v379
          %v424 = vunpack.c.l.b16 %v380
          %v425 = vunpack.c.l.b16 %v381
          %v426 = vunpack.c.l.b16 %v382
          %v427 = vunpack.c.l.b16 %v383
          %v428 = vunpack.c.l.b16 %v384
          %v429 = vunpack.c.l.b16 %v385
          %v430 = vunpack.c.l.b16 %v386
          %v431 = vunpack.c.l.b16 %v387
          %v432 = vunpack.c.l.b16 %v388
          %v433 = vunpack.c.l.b16 %v389
          %v434 = vunpack.c.l.b16 %v390
          %v435 = vunpack.c.l.b16 %v391
          %v436 = vunpack.c.l.b16 %v392
          %v437 = vunpack.c.l.b16 %v393
          %v438 = vpack.c.b16 %v423, %v422
          %v439 = vpack.c.b16 %v425, %v424
          %v440 = vpack.c.b16 %v427, %v426
          %v441 = vpack.c.b16 %v429, %v428
          %v442 = vpack.c.b16 %v431, %v430
          %v443 = vpack.c.b16 %v433, %v432
          %v444 = vpack.c.b16 %v435, %v434
          %v445 = vpack.c.b16 %v437, %v436
          %454 = vmatprep.subr.bf16.mxu0 0
          %455 = vmatpush1.bf16.msra.mxu0 %v438
          %456 = vmatprep.subr.bf16.mxu0 0
          %457 = vmatpush1.bf16.msra.mxu0 %v439
          %458 = vmatprep.subr.bf16.mxu0 0
          %459 = vmatpush1.bf16.msra.mxu0 %v440
          %460 = vmatprep.subr.bf16.mxu0 0
          %461 = vmatpush1.bf16.msra.mxu0 %v441
          %462 = vmatprep.subr.bf16.mxu0 0
          %463 = vmatpush1.bf16.msra.mxu0 %v442
          %464 = vmatprep.subr.bf16.mxu0 0
          %465 = vmatpush1.bf16.msra.mxu0 %v443
          %466 = vmatprep.subr.bf16.mxu0 0
          %467 = vmatpush1.bf16.msra.mxu0 %v444
          %468 = vmatprep.subr.bf16.mxu0 0
          %469 = vmatpush1.bf16.msra.mxu0 %v445
          %470 = vmatprep.subr.bf16.mxu0 0
          %471 = vmatpush1.bf16.msra.mxu0 0
          %472 = vmatprep.subr.bf16.mxu0 0
          %473 = vmatpush1.bf16.msra.mxu0 0
          %474 = vmatprep.subr.bf16.mxu0 0
          %475 = vmatpush1.bf16.msra.mxu0 0
          %476 = vmatprep.subr.bf16.mxu0 0
          %477 = vmatpush1.bf16.msra.mxu0 0
          %478 = vmatprep.subr.bf16.mxu0 0
          %479 = vmatpush1.bf16.msra.mxu0 0
          %480 = vmatprep.subr.bf16.mxu0 0
          %481 = vmatpush1.bf16.msra.mxu0 0
          %482 = vmatprep.subr.bf16.mxu0 0
          %483 = vmatpush1.bf16.msra.mxu0 0
          %484 = vmatprep.subr.bf16.mxu0 0
          %485 = vmatpush1.bf16.msra.mxu0 0
          %486 = vmatprep.mubr.bf16.mxu0 0
          %487 = vmatmul.mubr.bf16.gmra.mrb[0].mxu0 %v402
          %v488 = vpop.f32.mrb[0].mxu0
          %v489 = vadd.f32 0.0, %v488
          %v490 = vpop.f32.mrb[0].mxu0
          %v491 = vpop.f32.mrb[0].mxu0
          %v492 = vadd.f32 0.0, %v491
          %v493 = vpop.f32.mrb[0].mxu0
          %494 = vmatprep.mubr.bf16.mxu0 0
          %495 = vmatmul.mubr.bf16.gmra.mrb[0].mxu0 %v403
          %v496 = vpop.f32.mrb[0].mxu0
          %v497 = vadd.f32 0.0, %v496
          %v498 = vpop.f32.mrb[0].mxu0
          %v499 = vpop.f32.mrb[0].mxu0
          %v500 = vadd.f32 0.0, %v499
          %v501 = vpop.f32.mrb[0].mxu0
          %502 = vdwg.mxu0
          %v503 = vtanh.pop %v489
          %v504 = vtanh.pop %v492
          %v505 = vtanh.pop %v497
          %v506 = vtanh.pop %v500
          %v507 = vpack.c.bf16 %v504, %v503
          %v508 = vpack.c.bf16 %v506, %v505
          %v511 = vunpack.c.l.b16 %v507
          %v512 = vunpack.c.h.b16 %v507
          %v513 = vunpack.c.l.b16 %v508
          %v514 = vunpack.c.h.b16 %v508
          %v515 = vpack.c.b16 %v511, %v511
          %v516 = vpack.c.b16 %v512, %v512
          %v517 = vpack.c.b16 %v513, %v513
          %v518 = vpack.c.b16 %v514, %v514
          %523 = vst [vmem:[%s343] sm:$0xf] %v515
          %524 = vst [vmem:[%s343 + $0x4] sm:$0xf] %v516
          %525 = vst [vmem:[%s343 + $0x8] sm:$0xf] %v517
          %526 = vst [vmem:[%s343 + $0xc] sm:$0xf] %v518
          %vm527 = vcmask 7168
          %528 = vst.msk [vmem:[#allocation2] sm:$0xff] %vm527, -inf
          %529 = vst.msk [vmem:[#allocation2 + $0x8] sm:$0xff] %vm527, -inf
          %530 = vst.msk [vmem:[#allocation2 + $0x10] sm:$0xff] %vm527, -inf
          %531 = vst.msk [vmem:[#allocation2 + $0x18] sm:$0xff] %vm527, -inf
          %532 = vst.msk [vmem:[#allocation3] sm:$0xff] %vm527, 0.0
          %533 = vst.msk [vmem:[#allocation3 + $0x8] sm:$0xff] %vm527, 0.0
          %534 = vst.msk [vmem:[#allocation3 + $0x10] sm:$0xff] %vm527, 0.0
          %535 = vst.msk [vmem:[#allocation3 + $0x18] sm:$0xff] %vm527, 0.0
          %536 = vst.msk [vmem:[#allocation4] sm:$0xff] %vm527, 0.0
          %537 = vst.msk [vmem:[#allocation4 + $0x8] sm:$0xff] %vm527, 0.0
          %538 = vst.msk [vmem:[#allocation4 + $0x10] sm:$0xff] %vm527, 0.0
          %539 = vst.msk [vmem:[#allocation4 + $0x18] sm:$0xff] %vm527, 0.0
        $region48: #{tpu_custom_call.1} parent=35 // pred_fallthru
          _
        %v540 = vld [vmem:[%s343] sm:$0xf]
        %v541 = vld [vmem:[%s343 + $0x4] sm:$0xf]
        %v542 = vld [vmem:[%s343 + $0x8] sm:$0xf]
        %v543 = vld [vmem:[%s343 + $0xc] sm:$0xf]
        %v544 = vld [vmem:[%s309] sm:$0xff]
        %v545 = vld [vmem:[%s309 + $0x8] sm:$0xff]
        %v546 = vld [vmem:[%s309 + $0x10] sm:$0xff]
        %v547 = vld [vmem:[%s309 + $0x18] sm:$0xff]
        %v548 = vld [vmem:[%s309 + $0x20] sm:$0xff]
        %v549 = vld [vmem:[%s309 + $0x28] sm:$0xff]
        %v550 = vld [vmem:[%s309 + $0x30] sm:$0xff]
        %v551 = vld [vmem:[%s309 + $0x38] sm:$0xff]
        %v552 = vld [vmem:[%s309 + $0x40] sm:$0xff]
        %v553 = vld [vmem:[%s309 + $0x48] sm:$0xff]
        %v554 = vld [vmem:[%s309 + $0x50] sm:$0xff]
        %v555 = vld [vmem:[%s309 + $0x58] sm:$0xff]
        %v556 = vld [vmem:[%s309 + $0x60] sm:$0xff]
        %v557 = vld [vmem:[%s309 + $0x68] sm:$0xff]
        %v558 = vld [vmem:[%s309 + $0x70] sm:$0xff]
        %v559 = vld [vmem:[%s309 + $0x78] sm:$0xff]
        %v564 = vunpack.c.l.b16 %v540
        %v565 = vunpack.c.l.b16 %v541
        %v566 = vunpack.c.l.b16 %v542
        %v567 = vunpack.c.l.b16 %v543
        %v568 = vpack.c.b16 %v565, %v564
        %v569 = vpack.c.b16 %v567, %v566
        %v588 = vunpack.c.l.b16 %v544
        %v589 = vunpack.c.h.b16 %v544
        %v590 = vunpack.c.l.b16 %v545
        %v591 = vunpack.c.h.b16 %v545
        %v592 = vunpack.c.l.b16 %v546
        %v593 = vunpack.c.h.b16 %v546
        %v594 = vunpack.c.l.b16 %v547
        %v595 = vunpack.c.h.b16 %v547
        %v596 = vunpack.c.l.b16 %v548
        %v597 = vunpack.c.h.b16 %v548
        %v598 = vunpack.c.l.b16 %v549
        %v599 = vunpack.c.h.b16 %v549
        %v600 = vunpack.c.l.b16 %v550
        %v601 = vunpack.c.h.b16 %v550
        %v602 = vunpack.c.l.b16 %v551
        %v603 = vunpack.c.h.b16 %v551
        %v604 = vunpack.c.l.b16 %v552
        %v605 = vunpack.c.h.b16 %v552
        %v606 = vunpack.c.l.b16 %v553
        %v607 = vunpack.c.h.b16 %v553
        %v608 = vunpack.c.l.b16 %v554
        %v609 = vunpack.c.h.b16 %v554
        %v610 = vunpack.c.l.b16 %v555
        %v611 = vunpack.c.h.b16 %v555
        %v612 = vunpack.c.l.b16 %v556
        %v613 = vunpack.c.h.b16 %v556
        %v614 = vunpack.c.l.b16 %v557
        %v615 = vunpack.c.h.b16 %v557
        %v616 = vunpack.c.l.b16 %v558
        %v617 = vunpack.c.h.b16 %v558
        %v618 = vunpack.c.l.b16 %v559
        %v619 = vunpack.c.h.b16 %v559
        %v620 = vpack.c.b16 %v590, %v588
        %v621 = vpack.c.b16 %v591, %v589
        %v622 = vpack.c.b16 %v594, %v592
        %v623 = vpack.c.b16 %v595, %v593
        %v624 = vpack.c.b16 %v598, %v596
        %v625 = vpack.c.b16 %v599, %v597
        %v626 = vpack.c.b16 %v602, %v600
        %v627 = vpack.c.b16 %v603, %v601
        %v628 = vpack.c.b16 %v606, %v604
        %v629 = vpack.c.b16 %v607, %v605
        %v630 = vpack.c.b16 %v610, %v608
        %v631 = vpack.c.b16 %v611, %v609
        %v632 = vpack.c.b16 %v614, %v612
        %v633 = vpack.c.b16 %v615, %v613
        %v634 = vpack.c.b16 %v618, %v616
        %v635 = vpack.c.b16 %v619, %v617
        %652 = vmatprep.subr.bf16.mxu0 %v621
        %653 = vmatpush1.bf16.msra.mxu0 %v620
        %654 = vmatprep.subr.bf16.mxu0 %v623
        %655 = vmatpush1.bf16.msra.mxu0 %v622
        %656 = vmatprep.subr.bf16.mxu0 %v625
        %657 = vmatpush1.bf16.msra.mxu0 %v624
        %658 = vmatprep.subr.bf16.mxu0 %v627
        %659 = vmatpush1.bf16.msra.mxu0 %v626
        %660 = vmatprep.subr.bf16.mxu0 %v629
        %661 = vmatpush1.bf16.msra.mxu0 %v628
        %662 = vmatprep.subr.bf16.mxu0 %v631
        %663 = vmatpush1.bf16.msra.mxu0 %v630
        %664 = vmatprep.subr.bf16.mxu0 %v633
        %665 = vmatpush1.bf16.msra.mxu0 %v632
        %666 = vmatprep.subr.bf16.mxu0 %v635
        %667 = vmatpush1.bf16.msra.mxu0 %v634
        %668 = vmatprep.subr.bf16.mxu0 0
        %669 = vmatpush1.bf16.msra.mxu0 0
        %670 = vmatprep.subr.bf16.mxu0 0
        %671 = vmatpush1.bf16.msra.mxu0 0
        %672 = vmatprep.subr.bf16.mxu0 0
        %673 = vmatpush1.bf16.msra.mxu0 0
        %674 = vmatprep.subr.bf16.mxu0 0
        %675 = vmatpush1.bf16.msra.mxu0 0
        %676 = vmatprep.subr.bf16.mxu0 0
        %677 = vmatpush1.bf16.msra.mxu0 0
        %678 = vmatprep.subr.bf16.mxu0 0
        %679 = vmatpush1.bf16.msra.mxu0 0
        %680 = vmatprep.subr.bf16.mxu0 0
        %681 = vmatpush1.bf16.msra.mxu0 0
        %682 = vmatprep.subr.bf16.mxu0 0
        %683 = vmatpush1.bf16.msra.mxu0 0
        %684 = vmatprep.mubr.bf16.mxu0 0
        %685 = vmatmul.mubr.bf16.gmra.mrb[0].mxu0 %v568
        %v686 = vpop.f32.mrb[0].mxu0
        %v687 = vadd.f32 0.0, %v686
        %v688 = vpop.f32.mrb[0].mxu0
        %v689 = vadd.f32 0.0, %v688
        %v690 = vpop.f32.mrb[0].mxu0
        %v691 = vadd.f32 0.0, %v690
        %v692 = vpop.f32.mrb[0].mxu0
        %v693 = vadd.f32 0.0, %v692
        %694 = vmatprep.mubr.bf16.mxu0 0
        %695 = vmatmul.mubr.bf16.gmra.mrb[0].mxu0 %v569
        %v696 = vpop.f32.mrb[0].mxu0
        %v697 = vadd.f32 0.0, %v696
        %v698 = vpop.f32.mrb[0].mxu0
        %v699 = vadd.f32 0.0, %v698
        %v700 = vpop.f32.mrb[0].mxu0
        %v701 = vadd.f32 0.0, %v700
        %v702 = vpop.f32.mrb[0].mxu0
        %v703 = vadd.f32 0.0, %v702
        %704 = vdwg.mxu0
        %v705 = vpack.c.bf16 %v691, %v687
        %v706 = vpack.c.bf16 %v693, %v689
        %v707 = vpack.c.bf16 %v701, %v697
        %v708 = vpack.c.bf16 %v703, %v699
        %v713 = vunpack.c.l.b16 %v705
        %v714 = vunpack.c.l.b16 %v706
        %v715 = vunpack.c.h.b16 %v705
        %v716 = vunpack.c.h.b16 %v706
        %v717 = vunpack.c.l.b16 %v707
        %v718 = vunpack.c.l.b16 %v708
        %v719 = vunpack.c.h.b16 %v707
        %v720 = vunpack.c.h.b16 %v708
        %v721 = vpack.c.b16 %v714, %v713
        %v722 = vpack.c.b16 %v716, %v715
        %v723 = vpack.c.b16 %v718, %v717
        %v724 = vpack.c.b16 %v720, %v719
        %729 = vst [vmem:[%s350] sm:$0xff] %v721
        %730 = vst [vmem:[%s350 + $0x8] sm:$0xff] %v722
        %731 = vst [vmem:[%s350 + $0x10] sm:$0xff] %v723
        %732 = vst [vmem:[%s350 + $0x18] sm:$0xff] %v724
        %v733 = vld [vmem:[%s364] sm:$0xff]
        %v734 = vld [vmem:[%s364 + $0x8] sm:$0xff]
        %v735 = vld [vmem:[%s364 + $0x10] sm:$0xff]
        %v736 = vld [vmem:[%s364 + $0x18] sm:$0xff]
        %s737 = smul.u32 %s35, 256
        %v738 = vstv %s737
        %v739 = vsub.s32 %v733, %v738
        %v740 = vsub.s32 %v734, %v738
        %v741 = vsub.s32 %v735, %v738
        %v742 = vsub.s32 %v736, %v738
        %v743 = vlaneseq
        %v744 = vand.u32 %v743, 127
        %v745 = vadd.s32 %v744, 128
        %v746 = vld [vmem:[#allocation4] sm:$0xff]
        %v747 = vld [vmem:[#allocation4 + $0x8] sm:$0xff]
        %v748 = vld [vmem:[#allocation4 + $0x10] sm:$0xff]
        %v749 = vld [vmem:[#allocation4 + $0x18] sm:$0xff]
        %750 = vset.pattern.permute.xlu0 0
        %751 = vperm.xlu0 %750, %v739
        %v752 = vpop.permute.xlu0 %751
        %753 = vset.pattern.permute.xlu0 0
        %754 = vperm.xlu0 %753, %v740
        %v755 = vpop.permute.xlu0 %754
        %756 = vset.pattern.permute.xlu0 0
        %757 = vperm.xlu0 %756, %v741
        %v758 = vpop.permute.xlu0 %757
        %759 = vset.pattern.permute.xlu0 0
        %760 = vperm.xlu0 %759, %v742
        %v761 = vpop.permute.xlu0 %760
        %vm762 = vcmp.eq.s32.totalorder %v744, %v752
        %vm763 = vcmp.eq.s32.totalorder %v745, %v752
        %vm764 = vcmp.eq.s32.totalorder %v744, %v755
        %vm765 = vcmp.eq.s32.totalorder %v745, %v755
        %vm766 = vcmp.eq.s32.totalorder %v744, %v758
        %vm767 = vcmp.eq.s32.totalorder %v745, %v758
        %vm768 = vcmp.eq.s32.totalorder %v744, %v761
        %vm769 = vcmp.eq.s32.totalorder %v745, %v761
        %v770 = vsel %vm762, %v687, 0.0
        %v771 = vsel %vm763, %v689, 0.0
        %v772 = vsel %vm764, %v691, 0.0
        %v773 = vsel %vm765, %v693, 0.0
        %v774 = vsel %vm766, %v697, 0.0
        %v775 = vsel %vm767, %v699, 0.0
        %v776 = vsel %vm768, %v701, 0.0
        %v777 = vsel %vm769, %v703, 0.0
        %v778 = vadd.f32 %v770, %v771
        %779 = vadd.xlane.f32.xlu0 %v778
        %v780 = vpop.xlane.xlu0 %779
        %v781 = vadd.f32 %v772, %v773
        %782 = vadd.xlane.f32.xlu0 %v781
        %v783 = vpop.xlane.xlu0 %782
        %v784 = vadd.f32 %v774, %v775
        %785 = vadd.xlane.f32.xlu0 %v784
        %v786 = vpop.xlane.xlu0 %785
        %v787 = vadd.f32 %v776, %v777
        %788 = vadd.xlane.f32.xlu0 %v787
        %v789 = vpop.xlane.xlu0 %788
        %v790 = vadd.f32 %v746, %v780
        %v791 = vadd.f32 %v747, %v783
        %v792 = vadd.f32 %v748, %v786
        %v793 = vadd.f32 %v749, %v789
        %vm794 = vcmask 7168
        %795 = vst.msk [vmem:[#allocation4] sm:$0xff] %vm794, %v790
        %796 = vst.msk [vmem:[#allocation4 + $0x8] sm:$0xff] %vm794, %v791
        %797 = vst.msk [vmem:[#allocation4 + $0x10] sm:$0xff] %vm794, %v792
        %798 = vst.msk [vmem:[#allocation4 + $0x18] sm:$0xff] %vm794, %v793
        %v799 = vld [vmem:[#allocation2] sm:$0xff]
        %v800 = vld [vmem:[#allocation2 + $0x8] sm:$0xff]
        %v801 = vld [vmem:[#allocation2 + $0x10] sm:$0xff]
        %v802 = vld [vmem:[#allocation2 + $0x18] sm:$0xff]
        %v803 = vmax.f32 %v687, %v689
        %804 = vmax.xlane.f32.xlu0 %v803
        %v805 = vpop.xlane.xlu0 %804
        %v806 = vmax.f32 %v691, %v693
        %807 = vmax.xlane.f32.xlu0 %v806
        %v808 = vpop.xlane.xlu0 %807
        %v809 = vmax.f32 %v697, %v699
        %810 = vmax.xlane.f32.xlu0 %v809
        %v811 = vpop.xlane.xlu0 %810
        %v812 = vmax.f32 %v701, %v703
        %813 = vmax.xlane.f32.xlu0 %v812
        %v814 = vpop.xlane.xlu0 %813
        %v815 = vmax.f32 %v799, %v805
        %v816 = vmax.f32 %v800, %v808
        %v817 = vmax.f32 %v801, %v811
        %v818 = vmax.f32 %v802, %v814
        %v819 = vld [vmem:[#allocation3] sm:$0xff]
        %v820 = vld [vmem:[#allocation3 + $0x8] sm:$0xff]
        %v821 = vld [vmem:[#allocation3 + $0x10] sm:$0xff]
        %v822 = vld [vmem:[#allocation3 + $0x18] sm:$0xff]
        %v823 = vsub.f32 %v799, %v815
        %v824 = vsub.f32 %v800, %v816
        %v825 = vsub.f32 %v801, %v817
        %v826 = vsub.f32 %v802, %v818
        %v827 = vmul.f32 %v823, 1.442695
        %v828 = vpow.pop %v827
        %v829 = vmul.f32 %v824, 1.442695
        %v830 = vpow.pop %v829
        %v831 = vmul.f32 %v825, 1.442695
        %v832 = vpow.pop %v831
        %v833 = vmul.f32 %v826, 1.442695
        %v834 = vpow.pop %v833
        %v835 = vmul.f32 %v819, %v828
        %v836 = vmul.f32 %v820, %v830
        %v837 = vmul.f32 %v821, %v832
        %v838 = vmul.f32 %v822, %v834
        %840 = vset.pattern.permute.xlu0 0
        %841 = vperm.xlu0 %840, %v815
        %v842 = vpop.permute.xlu0 %841
        %845 = vset.pattern.permute.xlu0 0
        %846 = vperm.xlu0 %845, %v816
        %v847 = vpop.permute.xlu0 %846
        %850 = vset.pattern.permute.xlu0 0
        %851 = vperm.xlu0 %850, %v817
        %v852 = vpop.permute.xlu0 %851
        %855 = vset.pattern.permute.xlu0 0
        %856 = vperm.xlu0 %855, %v818
        %v857 = vpop.permute.xlu0 %856
        %v859 = vsub.f32 %v687, %v842
        %v860 = vsub.f32 %v689, %v842
        %v861 = vsub.f32 %v691, %v847
        %v862 = vsub.f32 %v693, %v847
        %v863 = vsub.f32 %v697, %v852
        %v864 = vsub.f32 %v699, %v852
        %v865 = vsub.f32 %v701, %v857
        %v866 = vsub.f32 %v703, %v857
        %v867 = vmul.f32 %v859, 1.442695
        %v868 = vpow.pop %v867
        %v869 = vmul.f32 %v860, 1.442695
        %v870 = vpow.pop %v869
        %v871 = vmul.f32 %v861, 1.442695
        %v872 = vpow.pop %v871
        %v873 = vmul.f32 %v862, 1.442695
        %v874 = vpow.pop %v873
        %v875 = vmul.f32 %v863, 1.442695
        %v876 = vpow.pop %v875
        %v877 = vmul.f32 %v864, 1.442695
        %v878 = vpow.pop %v877
        %v879 = vmul.f32 %v865, 1.442695
        %v880 = vpow.pop %v879
        %v881 = vmul.f32 %v866, 1.442695
        %v882 = vpow.pop %v881
        %v883 = vadd.f32 %v868, %v870
        %884 = vadd.xlane.f32.xlu0 %v883
        %v885 = vpop.xlane.xlu0 %884
        %v886 = vadd.f32 %v872, %v874
        %887 = vadd.xlane.f32.xlu0 %v886
        %v888 = vpop.xlane.xlu0 %887
        %v889 = vadd.f32 %v876, %v878
        %890 = vadd.xlane.f32.xlu0 %v889
        %v891 = vpop.xlane.xlu0 %890
        %v892 = vadd.f32 %v880, %v882
        %893 = vadd.xlane.f32.xlu0 %v892
        %v894 = vpop.xlane.xlu0 %893
        %v895 = vadd.f32 %v835, %v885
        %v896 = vadd.f32 %v836, %v888
        %v897 = vadd.f32 %v837, %v891
        %v898 = vadd.f32 %v838, %v894
        %899 = vst.msk [vmem:[#allocation3] sm:$0xff] %vm794, %v895
        %900 = vst.msk [vmem:[#allocation3 + $0x8] sm:$0xff] %vm794, %v896
        %901 = vst.msk [vmem:[#allocation3 + $0x10] sm:$0xff] %vm794, %v897
        %902 = vst.msk [vmem:[#allocation3 + $0x18] sm:$0xff] %vm794, %v898
        %903 = vst.msk [vmem:[#allocation2] sm:$0xff] %vm794, %v815
        %904 = vst.msk [vmem:[#allocation2 + $0x8] sm:$0xff] %vm794, %v816
        %905 = vst.msk [vmem:[#allocation2 + $0x10] sm:$0xff] %vm794, %v817
        %906 = vst.msk [vmem:[#allocation2 + $0x18] sm:$0xff] %vm794, %v818
        %p907 = scmp.eq.s32.totalorder %s35, 1
        // Predicated region
        $region49: #{tpu_custom_call.1} parent=35 // pred_check
          %p908 = pneg %p907
        $region50: #{tpu_custom_call.1} parent=35 // pred_check_branch
          %910 = sbr.rel (%p908) target = $region52
        $region51: #{tpu_custom_call.1} parent=35 // pred_region
          %v911 = vld [vmem:[#allocation2] sm:$0xff]
          %v912 = vld [vmem:[#allocation2 + $0x8] sm:$0xff]
          %v913 = vld [vmem:[#allocation2 + $0x10] sm:$0xff]
          %v914 = vld [vmem:[#allocation2 + $0x18] sm:$0xff]
          %v915 = vld [vmem:[#allocation3] sm:$0xff]
          %v916 = vld [vmem:[#allocation3 + $0x8] sm:$0xff]
          %v917 = vld [vmem:[#allocation3 + $0x10] sm:$0xff]
          %v918 = vld [vmem:[#allocation3 + $0x18] sm:$0xff]
          %v919 = vlog2.pop %v915
          %v920 = vmul.f32 %v919, 0.6931472
          %v921 = vlog2.pop %v916
          %v922 = vmul.f32 %v921, 0.6931472
          %v923 = vlog2.pop %v917
          %v924 = vmul.f32 %v923, 0.6931472
          %v925 = vlog2.pop %v918
          %v926 = vmul.f32 %v925, 0.6931472
          %v927 = vadd.f32 %v911, %v920
          %v928 = vadd.f32 %v912, %v922
          %v929 = vadd.f32 %v913, %v924
          %v930 = vadd.f32 %v914, %v926
          %v931 = vld [vmem:[%s364] sm:$0xff]
          %v932 = vld [vmem:[%s364 + $0x8] sm:$0xff]
          %v933 = vld [vmem:[%s364 + $0x10] sm:$0xff]
          %v934 = vld [vmem:[%s364 + $0x18] sm:$0xff]
          %vm935 = vcmp.ge.s32.totalorder %v931, 0
          %vm936 = vcmp.ge.s32.totalorder %v932, 0
          %vm937 = vcmp.ge.s32.totalorder %v933, 0
          %vm938 = vcmp.ge.s32.totalorder %v934, 0
          %v939 = vsel %vm935, 1, 0
          %v940 = vsel %vm936, 1, 0
          %v941 = vsel %vm937, 1, 0
          %v942 = vsel %vm938, 1, 0
          %v943 = vcvt.s32.f32 %v939
          %v944 = vcvt.s32.f32 %v940
          %v945 = vcvt.s32.f32 %v941
          %v946 = vcvt.s32.f32 %v942
          %v947 = vld [vmem:[#allocation4] sm:$0xff]
          %v948 = vld [vmem:[#allocation4 + $0x8] sm:$0xff]
          %v949 = vld [vmem:[#allocation4 + $0x10] sm:$0xff]
          %v950 = vld [vmem:[#allocation4 + $0x18] sm:$0xff]
          %v951 = vsub.f32 %v927, %v947
          %v952 = vsub.f32 %v928, %v948
          %v953 = vsub.f32 %v929, %v949
          %v954 = vsub.f32 %v930, %v950
          %v955 = vmul.f32 %v943, %v951
          %v956 = vmul.f32 %v944, %v952
          %v957 = vmul.f32 %v945, %v953
          %v958 = vmul.f32 %v946, %v954
          %v959 = vsel %vm794, %v955, 0.0
          %v960 = vsel %vm794, %v956, 0.0
          %v961 = vadd.f32 %v959, %v960
          %v962 = vsel %vm794, %v957, 0.0
          %v963 = vadd.f32 %v961, %v962
          %v964 = vsel %vm794, %v958, 0.0
          %v965 = vadd.f32 %v963, %v964
          %966 = vadd.xlane.f32.xlu0 %v965
          %v967 = vpop.xlane.xlu0 %966
          %v968 = vrot.slane %v967, 4
          %v969 = vadd.f32 %v967, %v968
          %v970 = vrot.slane %v969, 2
          %v971 = vadd.f32 %v969, %v970
          %v972 = vrot.slane %v971, 1
          %v973 = vadd.f32 %v971, %v972
          %s974 = vtos %v973
          %v975 = vstv %s974
          %976 = vst [vmem:[%s357] sm:$0xff] %v975
        $region52: #{tpu_custom_call.1} parent=35 // pred_fallthru
          _
        %s977 = sand.u32 %s149, 1
        %s978 = scalar_lea.sflag [#allocation7], %s977
        %s979 = sand.u32 %s149, 1
        %s980 = smul.addr %s979, 16
        %s981 = scalar_lea.vmem [#allocation10], %s980
        %s982 = sand.u32 %s30, 1
        %s983 = scalar_lea.sflag [#allocation12], %s982
        %s984 = sand.u32 %s177, 1
        %s985 = smul.addr %s984, 32
        %s986 = scalar_lea.vmem [#allocation11], %s985
        %s987 = sand.u32 %s30, 1
        %s988 = scalar_lea.sflag [#allocation12], %s987
        %s989 = sand.u32 %s203, 1
        %s990 = smul.addr %s989, 8
        %s991 = scalar_lea.vmem [#allocation13], %s990
        // Predicated region
        $region53: #{tpu_custom_call.1} parent=35 // pred_check
          %p992 = pneg %p159
        $region54: #{tpu_custom_call.1} parent=35 // pred_check_branch
          %994 = sbr.rel (%p992) target = $region56
        $region55: #{tpu_custom_call.1} parent=35 // pred_region
          %s995 = smul.u32 4, %s34
          %s997 = ssub.s32 256, 256
          %998 = vsyncadd %s978, %s997
          %s999 = smul.addr %s995, 64
          %s1000 = scalar_lea.hbm %s4, %s999
          %s1001 = sshll.u32 %s981, 4
          %s1002 = int_to_ptr.vmem [resolvable:$true] %s1001
          %1007 = dma.vmem_to_hbm [thread:$0]  %s1002, 256, %s1000, %s978, 64, 64, 4
        $region56: #{tpu_custom_call.1} parent=35 // pred_fallthru
          _
        // Predicated region
        $region57: #{tpu_custom_call.1} parent=35 // pred_check
          %p1008 = pneg %p187
        $region58: #{tpu_custom_call.1} parent=35 // pred_check_branch
          %1010 = sbr.rel (%p1008) target = $region60
        $region59: #{tpu_custom_call.1} parent=35 // pred_region
          %s1011 = smul.u32 4, %s34
          %s1012 = smul.u32 2, %s35
          %s1014 = ssub.s32 512, 512
          %1015 = vsyncadd %s983, %s1014
          %s1016 = smul.addr %s1011, 4
          %s1017 = sadd.s32 %s1012, %s1016
          %s1018 = smul.addr %s1017, 64
          %s1019 = scalar_lea.hbm %s5, %s1018
          %s1020 = sshll.u32 %s986, 4
          %s1021 = int_to_ptr.vmem [resolvable:$true] %s1020
          %1026 = dma.vmem_to_hbm [thread:$0]  %s1021, 512, %s1019, %s983, 128, 256, 8
        $region60: #{tpu_custom_call.1} parent=35 // pred_fallthru
          _
        // Predicated region
        $region61: #{tpu_custom_call.1} parent=35 // pred_check
          %p1027 = pneg %p213
        $region62: #{tpu_custom_call.1} parent=35 // pred_check_branch
          %1029 = sbr.rel (%p1027) target = $region64
        $region63: #{tpu_custom_call.1} parent=35 // pred_region
          %s1031 = ssub.s32 128, 128
          %1032 = vsyncadd %s988, %s1031
          %s1033 = smul.addr %s34, 128
          %s1034 = scalar_lea.hbm %s6, %s1033
          %s1036 = sshll.u32 %s991, 4
          %s1037 = int_to_ptr.vmem [resolvable:$true] %s1036
          %1039 = dma.vmem_to_hbm [thread:$0]  %s1037, 128, %s1034, %s988
        $region64: #{tpu_custom_call.1} parent=35 // pred_fallthru
          _
      $region36: #{tpu_custom_call.1} parent=5 // pred_fallthru
        _
      %p1040 = scmp.le.s32.totalorder 2, %s25
      // Predicated region
      $region65: #{tpu_custom_call.1} parent=5 // pred_check
        %p1041 = pneg %p1040
      $region66: #{tpu_custom_call.1} parent=5 // pred_check_branch
        %1043 = sbr.rel (%p1041) target = $region68
      $region67: #{tpu_custom_call.1} parent=5 // pred_region
        %s1044 = ssub.s32 %s25, 2
        // Predicated region
        $region69: #{tpu_custom_call.1} parent=67 // pred_check
          %p1045 = pneg %p165
        $region70: #{tpu_custom_call.1} parent=67 // pred_check_branch
          %1047 = sbr.rel (%p1045) target = $region72
        $region71: #{tpu_custom_call.1} parent=67 // pred_region
          %s1048 = sand.u32 %s150, 1
          %s1049 = scalar_lea.sflag [#allocation7], %s1048
          %s1050 = sand.u32 %s150, 1
          %s1051 = smul.addr %s1050, 16
          %s1052 = scalar_lea.vmem [#allocation10], %s1051
          %1053 = dma.done %s1049, 256
        $region72: #{tpu_custom_call.1} parent=67 // pred_fallthru
          _
        // Predicated region
        $region73: #{tpu_custom_call.1} parent=67 // pred_check
          %p1054 = pneg %p193
        $region74: #{tpu_custom_call.1} parent=67 // pred_check_branch
          %1056 = sbr.rel (%p1054) target = $region76
        $region75: #{tpu_custom_call.1} parent=67 // pred_region
          %s1057 = sand.u32 %s31, 1
          %s1058 = scalar_lea.sflag [#allocation12], %s1057
          %s1059 = sand.u32 %s178, 1
          %s1060 = smul.addr %s1059, 32
          %s1061 = scalar_lea.vmem [#allocation11], %s1060
          %1062 = dma.done %s1058, 512
        $region76: #{tpu_custom_call.1} parent=67 // pred_fallthru
          _
        // Predicated region
        $region77: #{tpu_custom_call.1} parent=67 // pred_check
          %p1063 = pneg %p219
        $region78: #{tpu_custom_call.1} parent=67 // pred_check_branch
          %1065 = sbr.rel (%p1063) target = $region80
        $region79: #{tpu_custom_call.1} parent=67 // pred_region
          %s1066 = sand.u32 %s31, 1
          %s1067 = scalar_lea.sflag [#allocation12], %s1066
          %s1068 = sand.u32 %s204, 1
          %s1069 = smul.addr %s1068, 8
          %s1070 = scalar_lea.vmem [#allocation13], %s1069
          %1071 = dma.done %s1067, 128
        $region80: #{tpu_custom_call.1} parent=67 // pred_fallthru
          _
      $region68: #{tpu_custom_call.1} parent=5 // pred_fallthru
        _
    $region6: #{tpu_custom_call.1} parent=1 // loop_footer
      %s29 = sadd.s32 1, %s25
    $region7: #{tpu_custom_call.1} parent=1 // loop_footer_branch
      %24 = sbr.rel target = $region3
    $region8: #{tpu_custom_call.1} parent=1 // loop_exit
      _
    %1072 = vsyncpa [#allocation6], 1
    %s1073 = scalar_lea.sflag [#allocation6], 1
    %1074 = vsyncpa %s1073, 1
    %1075 = vsyncpa [#allocation9], 1
    %s1076 = scalar_lea.sflag [#allocation9], 1
    %1077 = vsyncpa %s1076, 1
    %1078 = vsyncpa [#allocation7], 1
    %s1079 = scalar_lea.sflag [#allocation7], 1
    %1080 = vsyncpa %s1079, 1
    %1081 = vsyncpa [#allocation12], 1
    %s1082 = scalar_lea.sflag [#allocation12], 1
    %1083 = vsyncpa %s1082, 1

// kernel: tpu_custom_call.1
$region0: #{tpu_custom_call.1}
  #allocation0 [shape = 'u32[]', space=smem, size = 0x4, offset = 0x4, fixed_abs, tag = 'smem constant byte address 0x4 - core index']
  #allocation1 [shape = 'u32[144,128]{1,0:T(1,128)}', space=vmem, size = 0x12000, scoped, tag = 'internal scratch']
  #allocation2 [shape = 'f32[32,1]{1,0:T(8,128)}', space=vmem, size = 0x4000, scoped, tag = 'scratch operand']
  #allocation3 [shape = 'f32[32,1]{1,0:T(8,128)}', space=vmem, size = 0x4000, scoped, tag = 'scratch operand']
  #allocation4 [shape = 'f32[32,1]{1,0:T(8,128)}', space=vmem, size = 0x4000, scoped, tag = 'scratch operand']
  %s0 = inlined_call_operand.hbm [shape: bf16[64,128], index: 0, kind: input, shape index: {}]
  %s1 = inlined_call_operand.vmem [shape: bf16[128,128], index: 1, kind: input, shape index: {}]
  %s2 = inlined_call_operand.hbm [shape: bf16[128,512], index: 2, kind: input, shape index: {}]
  %s3 = inlined_call_operand.vmem [shape: s32[64,1], index: 3, kind: input, shape index: {}]
  %s4 = inlined_call_operand.hbm [shape: bf16[64,128], index: 4, kind: output, shape index: {0}]
  %s5 = inlined_call_operand.hbm [shape: bf16[64,512], index: 5, kind: output, shape index: {1}]
  %s6 = inlined_call_operand.hbm [shape: f32[16,128], index: 6, kind: output, shape index: {2}]
  %7 = xla_tuple %s4, %s5, %s6
  %s8 = sld [smem:[#allocation0]]
  $region81: #{tpu_custom_call.1} parent=0
    _
  %s10 = ssub.s32 1, %s8
  %s11 = scalar_select 0, %s10, %s8
  $region1: #{tpu_custom_call.1} parent=0
    #allocation5 [shape = 'u8[16384]{0}', space=vmem, size = 0x4000, scoped, tag = 'input window, operand 0']
    #allocation6 [shape = 's32[2]{0}', space=sflag, size = 0x8, scoped, tag = 'scoped memory for tpu_custom_call.1']
    #allocation7 [shape = 's32[2]{0}', space=sflag, size = 0x8, scoped, tag = 'scoped memory for tpu_custom_call.1']
    #allocation8 [shape = 'u8[131072]{0}', space=vmem, size = 0x20000, scoped, tag = 'input window, operand 2']
    #allocation9 [shape = 's32[2]{0}', space=sflag, size = 0x8, scoped, tag = 'scoped memory for tpu_custom_call.1']
    #allocation10 [shape = 'u8[16384]{0}', space=vmem, size = 0x4000, scoped, tag = 'output window, operand 0']
    #allocation11 [shape = 'u8[32768]{0}', space=vmem, size = 0x8000, scoped, tag = 'output window, operand 1']
    #allocation12 [shape = 's32[2]{0}', space=sflag, size = 0x8, scoped, tag = 'scoped memory for tpu_custom_call.1']
    #allocation13 [shape = 'u8[8192]{0}', space=vmem, size = 0x2000, scoped, tag = 'output window, operand 2']
    %12 = vsyncpa [#allocation6], 0
    %s13 = scalar_lea.sflag [#allocation6], 1
    %14 = vsyncpa %s13, 0
    %15 = vsyncpa [#allocation9], 0
    %s16 = scalar_lea.sflag [#allocation9], 1
    %17 = vsyncpa %s16, 0
    %18 = vsyncpa [#allocation7], 0
    %s19 = scalar_lea.sflag [#allocation7], 1
    %20 = vsyncpa %s19, 0
    %21 = vsyncpa [#allocation12], 0
    %s22 = scalar_lea.sflag [#allocation12], 1
    %23 = vsyncpa %s22, 0
    loop: start=0, step=1, limit=6
    $region2: #{tpu_custom_call.1} parent=1 // loop_pre_header
      _
    $region3: #{tpu_custom_call.1} parent=1 // loop_header
      %s25 = sphi 0, %s29
      %p26 = scmp.ge.s32.totalorder %s25, 6
      %s32 = sphi 0, %s44
      %s33 = sphi 0, %s40
      %s34 = sphi 0, %s32
      %s35 = sphi 0, %s33
      %s36 = sphi 0, %s34
      %s37 = sphi 0, %s35
      %s47 = sphi 0, %s49
      %s50 = sphi 0, %s47
      %s51 = sphi 0, %s50
      %s67 = sphi 0, %s51
      %s71 = sphi 0, %s71
      %s73 = sphi 0, %s71
      %s74 = sphi 0, %s73
      %s88 = sphi 0, %s74
      %s94 = sphi 0, %s96
      %s97 = sphi 0, %s94
      %s98 = sphi 0, %s97
      %s114 = sphi 0, %s98
      %s120 = sphi 0, %s122
      %s123 = sphi 0, %s120
      %s124 = sphi 0, %s123
      %s140 = sphi 0, %s124
      %s146 = sphi 0, %s148
      %s149 = sphi 0, %s146
      %s150 = sphi 0, %s149
      %s166 = sphi 0, %s150
      %s174 = sphi 0, %s176
      %s177 = sphi 0, %s174
      %s178 = sphi 0, %s177
      %s194 = sphi 0, %s178
      %s200 = sphi 0, %s202
      %s203 = sphi 0, %s200
      %s204 = sphi 0, %s203
      %s220 = sphi 0, %s204
    $region4: #{tpu_custom_call.1} parent=1 // loop_header_branch
      %28 = sbr.rel (%p26) target = $region8
    $region5: #{tpu_custom_call.1} parent=1 // loop_body
      %s30 = ssub.s32 %s25, 1
      %s31 = ssub.s32 %s25, 2
      %s38 = sadd.s32 1, %s33
      %p39 = scmp.ge.s32.totalorder %s38, 2
      %s40 = scalar_select %p39, 0, %s38
      %s41 = sadd.s32 1, %s32
      %s42 = scalar_select %p39, %s41, %s32
      %p43 = scmp.ge.s32.totalorder %s42, 2
      %s44 = scalar_select %p43, 0, %s42
      %s45 = ssub.s32 %s32, %s44
      %p46 = scmp.eq.s32.totalorder %s45, 0
      %s48 = sadd.s32 %s47, 1
      %s49 = scalar_select %p46, %s47, %s48
      %p52 = pneg %p46
      %p53 = scmp.eq.s32.totalorder %s25, 3
      %p54 = por %p52, %p53
      %p55 = scmp.ne.s32.totalorder %s47, %s50
      %p56 = scmp.eq.s32.totalorder %s25, 0
      %p57 = por %p55, %p56
      %p58 = scmp.ne.s32.totalorder %s47, %s50
      %p59 = scmp.eq.s32.totalorder %s30, 3
      %p60 = por %p58, %p59
      %p61 = scmp.ne.s32.totalorder %s50, %s51
      %p62 = scmp.eq.s32.totalorder %s30, 0
      %p63 = por %p61, %p62
      %p64 = scmp.ne.s32.totalorder %s50, %s51
      %p65 = scmp.eq.s32.totalorder %s31, 3
      %p66 = por %p64, %p65
      %p68 = scmp.ne.s32.totalorder %s51, %s67
      %p69 = scmp.eq.s32.totalorder %s31, 0
      %p70 = por %p68, %p69
      %s72 = sadd.s32 %s71, 1
      %p75 = scmp.eq.s32.totalorder %s25, 3
      %p76 = scmp.ne.s32.totalorder %s71, %s73
      %p77 = scmp.eq.s32.totalorder %s25, 0
      %p78 = por %p76, %p77
      %p79 = scmp.ne.s32.totalorder %s71, %s73
      %p80 = scmp.eq.s32.totalorder %s30, 3
      %p81 = por %p79, %p80
      %p82 = scmp.ne.s32.totalorder %s73, %s74
      %p83 = scmp.eq.s32.totalorder %s30, 0
      %p84 = por %p82, %p83
      %p85 = scmp.ne.s32.totalorder %s73, %s74
      %p86 = scmp.eq.s32.totalorder %s31, 3
      %p87 = por %p85, %p86
      %p89 = scmp.ne.s32.totalorder %s74, %s88
      %p90 = scmp.eq.s32.totalorder %s31, 0
      %p91 = por %p89, %p90
      %s92 = ssub.s32 %s33, %s40
      %p93 = scmp.eq.s32.totalorder %s92, 0
      %s95 = sadd.s32 %s94, 1
      %s96 = scalar_select %p93, %s94, %s95
      %p99 = pneg %p93
      %p100 = scmp.eq.s32.totalorder %s25, 3
      %p101 = por %p99, %p100
      %p102 = scmp.ne.s32.totalorder %s94, %s97
      %p103 = scmp.eq.s32.totalorder %s25, 0
      %p104 = por %p102, %p103
      %p105 = scmp.ne.s32.totalorder %s94, %s97
      %p106 = scmp.eq.s32.totalorder %s30, 3
      %p107 = por %p105, %p106
      %p108 = scmp.ne.s32.totalorder %s97, %s98
      %p109 = scmp.eq.s32.totalorder %s30, 0
      %p110 = por %p108, %p109
      %p111 = scmp.ne.s32.totalorder %s97, %s98
      %p112 = scmp.eq.s32.totalorder %s31, 3
      %p113 = por %p111, %p112
      %p115 = scmp.ne.s32.totalorder %s98, %s114
      %p116 = scmp.eq.s32.totalorder %s31, 0
      %p117 = por %p115, %p116
      %s118 = ssub.s32 %s32, %s44
      %p119 = scmp.eq.s32.totalorder %s118, 0
      %s121 = sadd.s32 %s120, 1
      %s122 = scalar_select %p119, %s120, %s121
      %p125 = pneg %p119
      %p126 = scmp.eq.s32.totalorder %s25, 3
      %p127 = por %p125, %p126
      %p128 = scmp.ne.s32.totalorder %s120, %s123
      %p129 = scmp.eq.s32.totalorder %s25, 0
      %p130 = por %p128, %p129
      %p131 = scmp.ne.s32.totalorder %s120, %s123
      %p132 = scmp.eq.s32.totalorder %s30, 3
      %p133 = por %p131, %p132
      %p134 = scmp.ne.s32.totalorder %s123, %s124
      %p135 = scmp.eq.s32.totalorder %s30, 0
      %p136 = por %p134, %p135
      %p137 = scmp.ne.s32.totalorder %s123, %s124
      %p138 = scmp.eq.s32.totalorder %s31, 3
      %p139 = por %p137, %p138
      %p141 = scmp.ne.s32.totalorder %s124, %s140
      %p142 = scmp.eq.s32.totalorder %s31, 0
      %p143 = por %p141, %p142
      %s144 = ssub.s32 %s32, %s44
      %p145 = scmp.eq.s32.totalorder %s144, 0
      %s147 = sadd.s32 %s146, 1
      %s148 = scalar_select %p145, %s146, %s147
      %p151 = pneg %p145
      %p152 = scmp.eq.s32.totalorder %s25, 3
      %p153 = por %p151, %p152
      %p154 = scmp.ne.s32.totalorder %s146, %s149
      %p155 = scmp.eq.s32.totalorder %s25, 0
      %p156 = por %p154, %p155
      %p157 = scmp.ne.s32.totalorder %s146, %s149
      %p158 = scmp.eq.s32.totalorder %s30, 3
      %p159 = por %p157, %p158
      %p160 = scmp.ne.s32.totalorder %s149, %s150
      %p161 = scmp.eq.s32.totalorder %s30, 0
      %p162 = por %p160, %p161
      %p163 = scmp.ne.s32.totalorder %s149, %s150
      %p164 = scmp.eq.s32.totalorder %s31, 3
      %p165 = por %p163, %p164
      %p167 = scmp.ne.s32.totalorder %s150, %s166
      %p168 = scmp.eq.s32.totalorder %s31, 0
      %p169 = por %p167, %p168
      %s170 = ssub.s32 %s32, %s44
      %s171 = ssub.s32 %s33, %s40
      %s172 = sor.u32 %s170, %s171
      %p173 = scmp.eq.s32.totalorder %s172, 0
      %s175 = sadd.s32 %s174, 1
      %s176 = scalar_select %p173, %s174, %s175
      %p179 = pneg %p173
      %p180 = scmp.eq.s32.totalorder %s25, 3
      %p181 = por %p179, %p180
      %p182 = scmp.ne.s32.totalorder %s174, %s177
      %p183 = scmp.eq.s32.totalorder %s25, 0
      %p184 = por %p182, %p183
      %p185 = scmp.ne.s32.totalorder %s174, %s177
      %p186 = scmp.eq.s32.totalorder %s30, 3
      %p187 = por %p185, %p186
      %p188 = scmp.ne.s32.totalorder %s177, %s178
      %p189 = scmp.eq.s32.totalorder %s30, 0
      %p190 = por %p188, %p189
      %p191 = scmp.ne.s32.totalorder %s177, %s178
      %p192 = scmp.eq.s32.totalorder %s31, 3
      %p193 = por %p191, %p192
      %p195 = scmp.ne.s32.totalorder %s178, %s194
      %p196 = scmp.eq.s32.totalorder %s31, 0
      %p197 = por %p195, %p196
      %s198 = ssub.s32 %s32, %s44
      %p199 = scmp.eq.s32.totalorder %s198, 0
      %s201 = sadd.s32 %s200, 1
      %s202 = scalar_select %p199, %s200, %s201
      %p205 = pneg %p199
      %p206 = scmp.eq.s32.totalorder %s25, 3
      %p207 = por %p205, %p206
      %p208 = scmp.ne.s32.totalorder %s200, %s203
      %p209 = scmp.eq.s32.totalorder %s25, 0
      %p210 = por %p208, %p209
      %p211 = scmp.ne.s32.totalorder %s200, %s203
      %p212 = scmp.eq.s32.totalorder %s30, 3
      %p213 = por %p211, %p212
      %p214 = scmp.ne.s32.totalorder %s203, %s204
      %p215 = scmp.eq.s32.totalorder %s30, 0
      %p216 = por %p214, %p215
      %p217 = scmp.ne.s32.totalorder %s203, %s204
      %p218 = scmp.eq.s32.totalorder %s31, 3
      %p219 = por %p217, %p218
      %p221 = scmp.ne.s32.totalorder %s204, %s220
      %p222 = scmp.eq.s32.totalorder %s31, 0
      %p223 = por %p221, %p222
      %p224 = scmp.le.s32.totalorder 1, %s25
      %p225 = scmp.lt.s32.totalorder %s25, 5
      %p226 = pnand %p224, %p225
      %p227 = pneg %p226
      // Predicated region
      $region9: #{tpu_custom_call.1} parent=5 // pred_check
        _
      $region10: #{tpu_custom_call.1} parent=5 // pred_check_branch
        %229 = sbr.rel (%p226) target = $region12
      $region11: #{tpu_custom_call.1} parent=5 // pred_region
        %s230 = ssub.s32 %s25, 1
        // Predicated region
        $region13: #{tpu_custom_call.1} parent=11 // pred_check
          %p231 = pneg %p84
        $region14: #{tpu_custom_call.1} parent=11 // pred_check_branch
          %233 = sbr.rel (%p231) target = $region16
        $region15: #{tpu_custom_call.1} parent=11 // pred_region
          _
        $region16: #{tpu_custom_call.1} parent=11 // pred_fallthru
          _
      $region12: #{tpu_custom_call.1} parent=5 // pred_fallthru
        _
      %p234 = scmp.lt.s32.totalorder %s25, 4
      // Predicated region
      $region17: #{tpu_custom_call.1} parent=5 // pred_check
        %p235 = pneg %p234
      $region18: #{tpu_custom_call.1} parent=5 // pred_check_branch
        %237 = sbr.rel (%p235) target = $region20
      $region19: #{tpu_custom_call.1} parent=5 // pred_region
        // Predicated region
        $region21: #{tpu_custom_call.1} parent=19 // pred_check
          %p238 = pneg %p57
        $region22: #{tpu_custom_call.1} parent=19 // pred_check_branch
          %240 = sbr.rel (%p238) target = $region24
        $region23: #{tpu_custom_call.1} parent=19 // pred_region
          %s241 = sand.u32 %s47, 1
          %s242 = scalar_lea.sflag [#allocation6], %s241
          %s243 = sand.u32 %s47, 1
          %s244 = smul.addr %s243, 16
          %s245 = scalar_lea.vmem [#allocation5], %s244
          %s246 = smul.u32 4, %s32
          %s248 = ssub.s32 256, 256
          %249 = vsyncadd %s242, %s248
          %s250 = smul.addr %s246, 64
          %s251 = scalar_lea.hbm %s0, %s250
          %s252 = sshll.u32 %s245, 4
          %s253 = int_to_ptr.vmem [resolvable:$true] %s252
          %258 = dma.hbm_to_vmem [thread:$0]  %s251, 256, %s253, %s242, 64, 64, 4
        $region24: #{tpu_custom_call.1} parent=19 // pred_fallthru
          _
        // Predicated region
        $region25: #{tpu_custom_call.1} parent=19 // pred_check
          %p259 = pneg %p104
        $region26: #{tpu_custom_call.1} parent=19 // pred_check_branch
          %261 = sbr.rel (%p259) target = $region28
        $region27: #{tpu_custom_call.1} parent=19 // pred_region
          %s262 = sand.u32 %s94, 1
          %s263 = scalar_lea.sflag [#allocation9], %s262
          %s264 = sand.u32 %s94, 1
          %s265 = smul.addr %s264, 128
          %s266 = scalar_lea.vmem [#allocation8], %s265
          %s267 = smul.u32 2, %s33
          %s269 = ssub.s32 2048, 2048
          %270 = vsyncadd %s263, %s269
          %s271 = smul.addr %s267, 64
          %s272 = scalar_lea.hbm %s2, %s271
          %s273 = sshll.u32 %s266, 4
          %s274 = int_to_ptr.vmem [resolvable:$true] %s273
          %279 = dma.hbm_to_vmem [thread:$0]  %s272, 2048, %s274, %s263, 256, 128, 8
        $region28: #{tpu_custom_call.1} parent=19 // pred_fallthru
          _
        // Predicated region
        $region29: #{tpu_custom_call.1} parent=19 // pred_check
          %p280 = pneg %p130
        $region30: #{tpu_custom_call.1} parent=19 // pred_check_branch
          %282 = sbr.rel (%p280) target = $region32
        $region31: #{tpu_custom_call.1} parent=19 // pred_region
          %s283 = smul.u32 4, %s32
          %p284 = scmp.lt.s32.totalorder %s283, 7
          %s285 = scalar_select %p284, %s283, 7
          %s286 = smul.addr %s285, 8
          %s287 = scalar_lea.vmem %s3, %s286
          %s288 = smul.u32 4, %s32
        $region32: #{tpu_custom_call.1} parent=19 // pred_fallthru
          _
      $region20: #{tpu_custom_call.1} parent=5 // pred_fallthru
        _
      %p289 = scmp.le.s32.totalorder 1, %s25
      %p290 = scmp.lt.s32.totalorder %s25, 5
      %p291 = pnand %p289, %p290
      %p292 = pneg %p291
      // Predicated region
      $region33: #{tpu_custom_call.1} parent=5 // pred_check
        _
      $region34: #{tpu_custom_call.1} parent=5 // pred_check_branch
        %294 = sbr.rel (%p291) target = $region36
      $region35: #{tpu_custom_call.1} parent=5 // pred_region
        %s295 = ssub.s32 %s25, 1
        %s296 = sand.u32 %s50, 1
        %s297 = scalar_lea.sflag [#allocation6], %s296
        %s298 = sand.u32 %s50, 1
        %s299 = smul.addr %s298, 16
        %s300 = scalar_lea.vmem [#allocation5], %s299
        // Predicated region
        $region37: #{tpu_custom_call.1} parent=35 // pred_check
          %p301 = pneg %p63
        $region38: #{tpu_custom_call.1} parent=35 // pred_check_branch
          %303 = sbr.rel (%p301) target = $region40
        $region39: #{tpu_custom_call.1} parent=35 // pred_region
          %304 = dma.done %s297, 256
        $region40: #{tpu_custom_call.1} parent=35 // pred_fallthru
          _
        %s305 = sand.u32 %s97, 1
        %s306 = scalar_lea.sflag [#allocation9], %s305
        %s307 = sand.u32 %s97, 1
        %s308 = smul.addr %s307, 128
        %s309 = scalar_lea.vmem [#allocation8], %s308
        // Predicated region
        $region41: #{tpu_custom_call.1} parent=35 // pred_check
          %p310 = pneg %p110
        $region42: #{tpu_custom_call.1} parent=35 // pred_check_branch
          %312 = sbr.rel (%p310) target = $region44
        $region43: #{tpu_custom_call.1} parent=35 // pred_region
          %313 = dma.done %s306, 2048
        $region44: #{tpu_custom_call.1} parent=35 // pred_fallthru
          _
        %s314 = sand.u32 %s50, 1
        %s315 = scalar_lea.sflag [#allocation6], %s314
        %s316 = sand.u32 %s50, 1
        %s317 = smul.addr %s316, 16
        %s318 = scalar_lea.vmem [#allocation5], %s317
        %p319 = pneg %p63
        %p320 = pneg %p60
        %p321 = pneg %p84
        %p322 = pneg %p81
        %s323 = sand.u32 %s97, 1
        %s324 = scalar_lea.sflag [#allocation9], %s323
        %s325 = sand.u32 %s97, 1
        %s326 = smul.addr %s325, 128
        %s327 = scalar_lea.vmem [#allocation8], %s326
        %p328 = pneg %p110
        %p329 = pneg %p107
        %s330 = smul.u32 4, %s34
        %p331 = scmp.lt.s32.totalorder %s330, 7
        %s332 = scalar_select %p331, %s330, 7
        %s333 = smul.addr %s332, 8
        %s334 = scalar_lea.vmem %s3, %s333
        %p335 = pneg %p136
        %p336 = pneg %p133
        %p337 = pneg %p162
        %p338 = pneg %p159
        %s339 = sand.u32 %s149, 1
        %s340 = scalar_lea.sflag [#allocation7], %s339
        %s341 = sand.u32 %s149, 1
        %s342 = smul.addr %s341, 16
        %s343 = scalar_lea.vmem [#allocation10], %s342
        %p344 = pneg %p190
        %p345 = pneg %p187
        %s346 = sand.u32 %s30, 1
        %s347 = scalar_lea.sflag [#allocation12], %s346
        %s348 = sand.u32 %s177, 1
        %s349 = smul.addr %s348, 32
        %s350 = scalar_lea.vmem [#allocation11], %s349
        %p351 = pneg %p216
        %p352 = pneg %p213
        %s353 = sand.u32 %s30, 1
        %s354 = scalar_lea.sflag [#allocation12], %s353
        %s355 = sand.u32 %s203, 1
        %s356 = smul.addr %s355, 8
        %s357 = scalar_lea.vmem [#allocation13], %s356
        %s358 = smul.u32 4, %s34
        %s359 = smul.u32 2, %s35
        %s360 = smul.u32 4, %s34
        %p361 = scmp.lt.s32.totalorder %s360, 7
        %s362 = scalar_select %p361, %s360, 7
        %s363 = smul.addr %s362, 8
        %s364 = scalar_lea.vmem %s3, %s363
        %s365 = smul.u32 4, %s34
        %s366 = smul.u32 4, %s34
        %s367 = smul.u32 4, %s34
        %s368 = smul.u32 2, %s35
        %p370 = scmp.eq.s32.totalorder %s35, 0
        // Predicated region
        $region45: #{tpu_custom_call.1} parent=35 // pred_check
          %p371 = pneg %p370
        $region46: #{tpu_custom_call.1} parent=35 // pred_check_branch
          %373 = sbr.rel (%p371) target = $region48
        $region47: #{tpu_custom_call.1} parent=35 // pred_region
          %v374 = vld [vmem:[%s300] sm:$0xf]
          %v375 = vld [vmem:[%s300 + $0x4] sm:$0xf]
          %v376 = vld [vmem:[%s300 + $0x8] sm:$0xf]
          %v377 = vld [vmem:[%s300 + $0xc] sm:$0xf]
          %v378 = vld [vmem:[%s1] sm:$0xf]
          %v379 = vld [vmem:[%s1 + $0x4] sm:$0xf]
          %v380 = vld [vmem:[%s1 + $0x8] sm:$0xf]
          %v381 = vld [vmem:[%s1 + $0xc] sm:$0xf]
          %v382 = vld [vmem:[%s1 + $0x10] sm:$0xf]
          %v383 = vld [vmem:[%s1 + $0x14] sm:$0xf]
          %v384 = vld [vmem:[%s1 + $0x18] sm:$0xf]
          %v385 = vld [vmem:[%s1 + $0x1c] sm:$0xf]
          %v386 = vld [vmem:[%s1 + $0x20] sm:$0xf]
          %v387 = vld [vmem:[%s1 + $0x24] sm:$0xf]
          %v388 = vld [vmem:[%s1 + $0x28] sm:$0xf]
          %v389 = vld [vmem:[%s1 + $0x2c] sm:$0xf]
          %v390 = vld [vmem:[%s1 + $0x30] sm:$0xf]
          %v391 = vld [vmem:[%s1 + $0x34] sm:$0xf]
          %v392 = vld [vmem:[%s1 + $0x38] sm:$0xf]
          %v393 = vld [vmem:[%s1 + $0x3c] sm:$0xf]
          %v398 = vunpack.c.l.b16 %v374
          %v399 = vunpack.c.l.b16 %v375
          %v400 = vunpack.c.l.b16 %v376
          %v401 = vunpack.c.l.b16 %v377
          %v402 = vpack.c.b16 %v399, %v398
          %v403 = vpack.c.b16 %v401, %v400
          %v422 = vunpack.c.l.b16 %v378
          %v423 = vunpack.c.l.b16 %v379
          %v424 = vunpack.c.l.b16 %v380
          %v425 = vunpack.c.l.b16 %v381
          %v426 = vunpack.c.l.b16 %v382
          %v427 = vunpack.c.l.b16 %v383
          %v428 = vunpack.c.l.b16 %v384
          %v429 = vunpack.c.l.b16 %v385
          %v430 = vunpack.c.l.b16 %v386
          %v431 = vunpack.c.l.b16 %v387
          %v432 = vunpack.c.l.b16 %v388
          %v433 = vunpack.c.l.b16 %v389
          %v434 = vunpack.c.l.b16 %v390
          %v435 = vunpack.c.l.b16 %v391
          %v436 = vunpack.c.l.b16 %v392
          %v437 = vunpack.c.l.b16 %v393
          %v438 = vpack.c.b16 %v423, %v422
          %v439 = vpack.c.b16 %v425, %v424
          %v440 = vpack.c.b16 %v427, %v426
          %v441 = vpack.c.b16 %v429, %v428
          %v442 = vpack.c.b16 %v431, %v430
          %v443 = vpack.c.b16 %v433, %v432
          %v444 = vpack.c.b16 %v435, %v434
          %v445 = vpack.c.b16 %v437, %v436
          %454 = vmatprep.subr.bf16.mxu0 0
          %455 = vmatpush1.bf16.msra.mxu0 %v438
          %456 = vmatprep.subr.bf16.mxu0 0
          %457 = vmatpush1.bf16.msra.mxu0 %v439
          %458 = vmatprep.subr.bf16.mxu0 0
          %459 = vmatpush1.bf16.msra.mxu0 %v440
          %460 = vmatprep.subr.bf16.mxu0 0
          %461 = vmatpush1.bf16.msra.mxu0 %v441
          %462 = vmatprep.subr.bf16.mxu0 0
          %463 = vmatpush1.bf16.msra.mxu0 %v442
          %464 = vmatprep.subr.bf16.mxu0 0
          %465 = vmatpush1.bf16.msra.mxu0 %v443
          %466 = vmatprep.subr.bf16.mxu0 0
          %467 = vmatpush1.bf16.msra.mxu0 %v444
          %468 = vmatprep.subr.bf16.mxu0 0
          %469 = vmatpush1.bf16.msra.mxu0 %v445
          %470 = vmatprep.subr.bf16.mxu0 0
          %471 = vmatpush1.bf16.msra.mxu0 0
          %472 = vmatprep.subr.bf16.mxu0 0
          %473 = vmatpush1.bf16.msra.mxu0 0
          %474 = vmatprep.subr.bf16.mxu0 0
          %475 = vmatpush1.bf16.msra.mxu0 0
          %476 = vmatprep.subr.bf16.mxu0 0
          %477 = vmatpush1.bf16.msra.mxu0 0
          %478 = vmatprep.subr.bf16.mxu0 0
          %479 = vmatpush1.bf16.msra.mxu0 0
          %480 = vmatprep.subr.bf16.mxu0 0
          %481 = vmatpush1.bf16.msra.mxu0 0
          %482 = vmatprep.subr.bf16.mxu0 0
          %483 = vmatpush1.bf16.msra.mxu0 0
          %484 = vmatprep.subr.bf16.mxu0 0
          %485 = vmatpush1.bf16.msra.mxu0 0
          %486 = vmatprep.mubr.bf16.mxu0 0
          %487 = vmatmul.mubr.bf16.gmra.mrb[0].mxu0 %v402
          %v488 = vpop.f32.mrb[0].mxu0
          %v489 = vadd.f32 0.0, %v488
          %v490 = vpop.f32.mrb[0].mxu0
          %v491 = vpop.f32.mrb[0].mxu0
          %v492 = vadd.f32 0.0, %v491
          %v493 = vpop.f32.mrb[0].mxu0
          %494 = vmatprep.mubr.bf16.mxu0 0
          %495 = vmatmul.mubr.bf16.gmra.mrb[0].mxu0 %v403
          %v496 = vpop.f32.mrb[0].mxu0
          %v497 = vadd.f32 0.0, %v496
          %v498 = vpop.f32.mrb[0].mxu0
          %v499 = vpop.f32.mrb[0].mxu0
          %v500 = vadd.f32 0.0, %v499
          %v501 = vpop.f32.mrb[0].mxu0
          %502 = vdwg.mxu0
          %v503 = vtanh.pop %v489
          %v504 = vtanh.pop %v492
          %v505 = vtanh.pop %v497
          %v506 = vtanh.pop %v500
          %v507 = vpack.c.bf16 %v504, %v503
          %v508 = vpack.c.bf16 %v506, %v505
          %v511 = vunpack.c.l.b16 %v507
          %v512 = vunpack.c.h.b16 %v507
          %v513 = vunpack.c.l.b16 %v508
          %v514 = vunpack.c.h.b16 %v508
          %v515 = vpack.c.b16 %v511, %v511
          %v516 = vpack.c.b16 %v512, %v512
          %v517 = vpack.c.b16 %v513, %v513
          %v518 = vpack.c.b16 %v514, %v514
          %523 = vst [vmem:[%s343] sm:$0xf] %v515
          %524 = vst [vmem:[%s343 + $0x4] sm:$0xf] %v516
          %525 = vst [vmem:[%s343 + $0x8] sm:$0xf] %v517
          %526 = vst [vmem:[%s343 + $0xc] sm:$0xf] %v518
          %vm527 = vcmask 7168
          %528 = vst.msk [vmem:[#allocation2] sm:$0xff] %vm527, -inf
          %529 = vst.msk [vmem:[#allocation2 + $0x8] sm:$0xff] %vm527, -inf
          %530 = vst.msk [vmem:[#allocation2 + $0x10] sm:$0xff] %vm527, -inf
          %531 = vst.msk [vmem:[#allocation2 + $0x18] sm:$0xff] %vm527, -inf
          %532 = vst.msk [vmem:[#allocation3] sm:$0xff] %vm527, 0.0
          %533 = vst.msk [vmem:[#allocation3 + $0x8] sm:$0xff] %vm527, 0.0
          %534 = vst.msk [vmem:[#allocation3 + $0x10] sm:$0xff] %vm527, 0.0
          %535 = vst.msk [vmem:[#allocation3 + $0x18] sm:$0xff] %vm527, 0.0
          %536 = vst.msk [vmem:[#allocation4] sm:$0xff] %vm527, 0.0
          %537 = vst.msk [vmem:[#allocation4 + $0x8] sm:$0xff] %vm527, 0.0
          %538 = vst.msk [vmem:[#allocation4 + $0x10] sm:$0xff] %vm527, 0.0
          %539 = vst.msk [vmem:[#allocation4 + $0x18] sm:$0xff] %vm527, 0.0
        $region48: #{tpu_custom_call.1} parent=35 // pred_fallthru
          _
        %v540 = vld [vmem:[%s343] sm:$0xf]
        %v541 = vld [vmem:[%s343 + $0x4] sm:$0xf]
        %v542 = vld [vmem:[%s343 + $0x8] sm:$0xf]
        %v543 = vld [vmem:[%s343 + $0xc] sm:$0xf]
        %v544 = vld [vmem:[%s309] sm:$0xff]
        %v545 = vld [vmem:[%s309 + $0x8] sm:$0xff]
        %v546 = vld [vmem:[%s309 + $0x10] sm:$0xff]
        %v547 = vld [vmem:[%s309 + $0x18] sm:$0xff]
        %v548 = vld [vmem:[%s309 + $0x20] sm:$0xff]
        %v549 = vld [vmem:[%s309 + $0x28] sm:$0xff]
        %v550 = vld [vmem:[%s309 + $0x30] sm:$0xff]
        %v551 = vld [vmem:[%s309 + $0x38] sm:$0xff]
        %v552 = vld [vmem:[%s309 + $0x40] sm:$0xff]
        %v553 = vld [vmem:[%s309 + $0x48] sm:$0xff]
        %v554 = vld [vmem:[%s309 + $0x50] sm:$0xff]
        %v555 = vld [vmem:[%s309 + $0x58] sm:$0xff]
        %v556 = vld [vmem:[%s309 + $0x60] sm:$0xff]
        %v557 = vld [vmem:[%s309 + $0x68] sm:$0xff]
        %v558 = vld [vmem:[%s309 + $0x70] sm:$0xff]
        %v559 = vld [vmem:[%s309 + $0x78] sm:$0xff]
        %v564 = vunpack.c.l.b16 %v540
        %v565 = vunpack.c.l.b16 %v541
        %v566 = vunpack.c.l.b16 %v542
        %v567 = vunpack.c.l.b16 %v543
        %v568 = vpack.c.b16 %v565, %v564
        %v569 = vpack.c.b16 %v567, %v566
        %v588 = vunpack.c.l.b16 %v544
        %v589 = vunpack.c.h.b16 %v544
        %v590 = vunpack.c.l.b16 %v545
        %v591 = vunpack.c.h.b16 %v545
        %v592 = vunpack.c.l.b16 %v546
        %v593 = vunpack.c.h.b16 %v546
        %v594 = vunpack.c.l.b16 %v547
        %v595 = vunpack.c.h.b16 %v547
        %v596 = vunpack.c.l.b16 %v548
        %v597 = vunpack.c.h.b16 %v548
        %v598 = vunpack.c.l.b16 %v549
        %v599 = vunpack.c.h.b16 %v549
        %v600 = vunpack.c.l.b16 %v550
        %v601 = vunpack.c.h.b16 %v550
        %v602 = vunpack.c.l.b16 %v551
        %v603 = vunpack.c.h.b16 %v551
        %v604 = vunpack.c.l.b16 %v552
        %v605 = vunpack.c.h.b16 %v552
        %v606 = vunpack.c.l.b16 %v553
        %v607 = vunpack.c.h.b16 %v553
        %v608 = vunpack.c.l.b16 %v554
        %v609 = vunpack.c.h.b16 %v554
        %v610 = vunpack.c.l.b16 %v555
        %v611 = vunpack.c.h.b16 %v555
        %v612 = vunpack.c.l.b16 %v556
        %v613 = vunpack.c.h.b16 %v556
        %v614 = vunpack.c.l.b16 %v557
        %v615 = vunpack.c.h.b16 %v557
        %v616 = vunpack.c.l.b16 %v558
        %v617 = vunpack.c.h.b16 %v558
        %v618 = vunpack.c.l.b16 %v559
        %v619 = vunpack.c.h.b16 %v559
        %v620 = vpack.c.b16 %v590, %v588
        %v621 = vpack.c.b16 %v591, %v589
        %v622 = vpack.c.b16 %v594, %v592
        %v623 = vpack.c.b16 %v595, %v593
        %v624 = vpack.c.b16 %v598, %v596
        %v625 = vpack.c.b16 %v599, %v597
        %v626 = vpack.c.b16 %v602, %v600
        %v627 = vpack.c.b16 %v603, %v601
        %v628 = vpack.c.b16 %v606, %v604
        %v629 = vpack.c.b16 %v607, %v605
        %v630 = vpack.c.b16 %v610, %v608
        %v631 = vpack.c.b16 %v611, %v609
        %v632 = vpack.c.b16 %v614, %v612
        %v633 = vpack.c.b16 %v615, %v613
        %v634 = vpack.c.b16 %v618, %v616
        %v635 = vpack.c.b16 %v619, %v617
        %652 = vmatprep.subr.bf16.mxu0 %v621
        %653 = vmatpush1.bf16.msra.mxu0 %v620
        %654 = vmatprep.subr.bf16.mxu0 %v623
        %655 = vmatpush1.bf16.msra.mxu0 %v622
        %656 = vmatprep.subr.bf16.mxu0 %v625
        %657 = vmatpush1.bf16.msra.mxu0 %v624
        %658 = vmatprep.subr.bf16.mxu0 %v627
        %659 = vmatpush1.bf16.msra.mxu0 %v626
        %660 = vmatprep.subr.bf16.mxu0 %v629
        %661 = vmatpush1.bf16.msra.mxu0 %v628
        %662 = vmatprep.subr.bf16.mxu0 %v631
        %663 = vmatpush1.bf16.msra.mxu0 %v630
        %664 = vmatprep.subr.bf16.mxu0 %v633
        %665 = vmatpush1.bf16.msra.mxu0 %v632
        %666 = vmatprep.subr.bf16.mxu0 %v635
        %667 = vmatpush1.bf16.msra.mxu0 %v634
        %668 = vmatprep.subr.bf16.mxu0 0
        %669 = vmatpush1.bf16.msra.mxu0 0
        %670 = vmatprep.subr.bf16.mxu0 0
        %671 = vmatpush1.bf16.msra.mxu0 0
        %672 = vmatprep.subr.bf16.mxu0 0
        %673 = vmatpush1.bf16.msra.mxu0 0
        %674 = vmatprep.subr.bf16.mxu0 0
        %675 = vmatpush1.bf16.msra.mxu0 0
        %676 = vmatprep.subr.bf16.mxu0 0
        %677 = vmatpush1.bf16.msra.mxu0 0
        %678 = vmatprep.subr.bf16.mxu0 0
        %679 = vmatpush1.bf16.msra.mxu0 0
        %680 = vmatprep.subr.bf16.mxu0 0
        %681 = vmatpush1.bf16.msra.mxu0 0
        %682 = vmatprep.subr.bf16.mxu0 0
        %683 = vmatpush1.bf16.msra.mxu0 0
        %684 = vmatprep.mubr.bf16.mxu0 0
        %685 = vmatmul.mubr.bf16.gmra.mrb[0].mxu0 %v568
        %v686 = vpop.f32.mrb[0].mxu0
        %v687 = vadd.f32 0.0, %v686
        %v688 = vpop.f32.mrb[0].mxu0
        %v689 = vadd.f32 0.0, %v688
        %v690 = vpop.f32.mrb[0].mxu0
        %v691 = vadd.f32 0.0, %v690
        %v692 = vpop.f32.mrb[0].mxu0
        %v693 = vadd.f32 0.0, %v692
        %694 = vmatprep.mubr.bf16.mxu0 0
        %695 = vmatmul.mubr.bf16.gmra.mrb[0].mxu0 %v569
        %v696 = vpop.f32.mrb[0].mxu0
        %v697 = vadd.f32 0.0, %v696
        %v698 = vpop.f32.mrb[0].mxu0
        %v699 = vadd.f32 0.0, %v698
        %v700 = vpop.f32.mrb[0].mxu0
        %v701 = vadd.f32 0.0, %v700
        %v702 = vpop.f32.mrb[0].mxu0
        %v703 = vadd.f32 0.0, %v702
        %704 = vdwg.mxu0
        %v705 = vpack.c.bf16 %v691, %v687
        %v706 = vpack.c.bf16 %v693, %v689
        %v707 = vpack.c.bf16 %v701, %v697
        %v708 = vpack.c.bf16 %v703, %v699
        %v713 = vunpack.c.l.b16 %v705
        %v714 = vunpack.c.l.b16 %v706
        %v715 = vunpack.c.h.b16 %v705
        %v716 = vunpack.c.h.b16 %v706
        %v717 = vunpack.c.l.b16 %v707
        %v718 = vunpack.c.l.b16 %v708
        %v719 = vunpack.c.h.b16 %v707
        %v720 = vunpack.c.h.b16 %v708
        %v721 = vpack.c.b16 %v714, %v713
        %v722 = vpack.c.b16 %v716, %v715
        %v723 = vpack.c.b16 %v718, %v717
        %v724 = vpack.c.b16 %v720, %v719
        %729 = vst [vmem:[%s350] sm:$0xff] %v721
        %730 = vst [vmem:[%s350 + $0x8] sm:$0xff] %v722
        %731 = vst [vmem:[%s350 + $0x10] sm:$0xff] %v723
        %732 = vst [vmem:[%s350 + $0x18] sm:$0xff] %v724
        %v733 = vld [vmem:[%s364] sm:$0xff]
        %v734 = vld [vmem:[%s364 + $0x8] sm:$0xff]
        %v735 = vld [vmem:[%s364 + $0x10] sm:$0xff]
        %v736 = vld [vmem:[%s364 + $0x18] sm:$0xff]
        %s737 = smul.u32 %s35, 256
        %v738 = vstv %s737
        %v739 = vsub.s32 %v733, %v738
        %v740 = vsub.s32 %v734, %v738
        %v741 = vsub.s32 %v735, %v738
        %v742 = vsub.s32 %v736, %v738
        %v743 = vlaneseq
        %v744 = vand.u32 %v743, 127
        %v745 = vadd.s32 %v744, 128
        %v746 = vld [vmem:[#allocation4] sm:$0xff]
        %v747 = vld [vmem:[#allocation4 + $0x8] sm:$0xff]
        %v748 = vld [vmem:[#allocation4 + $0x10] sm:$0xff]
        %v749 = vld [vmem:[#allocation4 + $0x18] sm:$0xff]
        %750 = vset.pattern.permute.xlu0 0
        %751 = vperm.xlu0 %750, %v739
        %v752 = vpop.permute.xlu0 %751
        %753 = vset.pattern.permute.xlu0 0
        %754 = vperm.xlu0 %753, %v740
        %v755 = vpop.permute.xlu0 %754
        %756 = vset.pattern.permute.xlu0 0
        %757 = vperm.xlu0 %756, %v741
        %v758 = vpop.permute.xlu0 %757
        %759 = vset.pattern.permute.xlu0 0
        %760 = vperm.xlu0 %759, %v742
        %v761 = vpop.permute.xlu0 %760
        %vm762 = vcmp.eq.s32.totalorder %v744, %v752
        %vm763 = vcmp.eq.s32.totalorder %v745, %v752
        %vm764 = vcmp.eq.s32.totalorder %v744, %v755
        %vm765 = vcmp.eq.s32.totalorder %v745, %v755
        %vm766 = vcmp.eq.s32.totalorder %v744, %v758
        %vm767 = vcmp.eq.s32.totalorder %v745, %v758
        %vm768 = vcmp.eq.s32.totalorder %v744, %v761
        %vm769 = vcmp.eq.s32.totalorder %v745, %v761
        %v770 = vsel %vm762, %v687, 0.0
        %v771 = vsel %vm763, %v689, 0.0
        %v772 = vsel %vm764, %v691, 0.0
        %v773 = vsel %vm765, %v693, 0.0
        %v774 = vsel %vm766, %v697, 0.0
        %v775 = vsel %vm767, %v699, 0.0
        %v776 = vsel %vm768, %v701, 0.0
        %v777 = vsel %vm769, %v703, 0.0
        %v778 = vadd.f32 %v770, %v771
        %779 = vadd.xlane.f32.xlu0 %v778
        %v780 = vpop.xlane.xlu0 %779
        %v781 = vadd.f32 %v772, %v773
        %782 = vadd.xlane.f32.xlu0 %v781
        %v783 = vpop.xlane.xlu0 %782
        %v784 = vadd.f32 %v774, %v775
        %785 = vadd.xlane.f32.xlu0 %v784
        %v786 = vpop.xlane.xlu0 %785
        %v787 = vadd.f32 %v776, %v777
        %788 = vadd.xlane.f32.xlu0 %v787
        %v789 = vpop.xlane.xlu0 %788
        %v790 = vadd.f32 %v746, %v780
        %v791 = vadd.f32 %v747, %v783
        %v792 = vadd.f32 %v748, %v786
        %v793 = vadd.f32 %v749, %v789
        %vm794 = vcmask 7168
        %795 = vst.msk [vmem:[#allocation4] sm:$0xff] %vm794, %v790
        %796 = vst.msk [vmem:[#allocation4 + $0x8] sm:$0xff] %vm794, %v791
        %797 = vst.msk [vmem:[#allocation4 + $0x10] sm:$0xff] %vm794, %v792
        %798 = vst.msk [vmem:[#allocation4 + $0x18] sm:$0xff] %vm794, %v793
        %v799 = vld [vmem:[#allocation2] sm:$0xff]
        %v800 = vld [vmem:[#allocation2 + $0x8] sm:$0xff]
        %v801 = vld [vmem:[#allocation2 + $0x10] sm:$0xff]
        %v802 = vld [vmem:[#allocation2 + $0x18] sm:$0xff]
        %v803 = vmax.f32 %v687, %v689
        %804 = vmax.xlane.f32.xlu0 %v803
        %v805 = vpop.xlane.xlu0 %804
        %v806 = vmax.f32 %v691, %v693
        %807 = vmax.xlane.f32.xlu0 %v806
        %v808 = vpop.xlane.xlu0 %807
        %v809 = vmax.f32 %v697, %v699
        %810 = vmax.xlane.f32.xlu0 %v809
        %v811 = vpop.xlane.xlu0 %810
        %v812 = vmax.f32 %v701, %v703
        %813 = vmax.xlane.f32.xlu0 %v812
        %v814 = vpop.xlane.xlu0 %813
        %v815 = vmax.f32 %v799, %v805
        %v816 = vmax.f32 %v800, %v808
        %v817 = vmax.f32 %v801, %v811
        %v818 = vmax.f32 %v802, %v814
        %v819 = vld [vmem:[#allocation3] sm:$0xff]
        %v820 = vld [vmem:[#allocation3 + $0x8] sm:$0xff]
        %v821 = vld [vmem:[#allocation3 + $0x10] sm:$0xff]
        %v822 = vld [vmem:[#allocation3 + $0x18] sm:$0xff]
        %v823 = vsub.f32 %v799, %v815
        %v824 = vsub.f32 %v800, %v816
        %v825 = vsub.f32 %v801, %v817
        %v826 = vsub.f32 %v802, %v818
        %v827 = vmul.f32 %v823, 1.442695
        %v828 = vpow.pop %v827
        %v829 = vmul.f32 %v824, 1.442695
        %v830 = vpow.pop %v829
        %v831 = vmul.f32 %v825, 1.442695
        %v832 = vpow.pop %v831
        %v833 = vmul.f32 %v826, 1.442695
        %v834 = vpow.pop %v833
        %v835 = vmul.f32 %v819, %v828
        %v836 = vmul.f32 %v820, %v830
        %v837 = vmul.f32 %v821, %v832
        %v838 = vmul.f32 %v822, %v834
        %840 = vset.pattern.permute.xlu0 0
        %841 = vperm.xlu0 %840, %v815
        %v842 = vpop.permute.xlu0 %841
        %845 = vset.pattern.permute.xlu0 0
        %846 = vperm.xlu0 %845, %v816
        %v847 = vpop.permute.xlu0 %846
        %850 = vset.pattern.permute.xlu0 0
        %851 = vperm.xlu0 %850, %v817
        %v852 = vpop.permute.xlu0 %851
        %855 = vset.pattern.permute.xlu0 0
        %856 = vperm.xlu0 %855, %v818
        %v857 = vpop.permute.xlu0 %856
        %v859 = vsub.f32 %v687, %v842
        %v860 = vsub.f32 %v689, %v842
        %v861 = vsub.f32 %v691, %v847
        %v862 = vsub.f32 %v693, %v847
        %v863 = vsub.f32 %v697, %v852
        %v864 = vsub.f32 %v699, %v852
        %v865 = vsub.f32 %v701, %v857
        %v866 = vsub.f32 %v703, %v857
        %v867 = vmul.f32 %v859, 1.442695
        %v868 = vpow.pop %v867
        %v869 = vmul.f32 %v860, 1.442695
        %v870 = vpow.pop %v869
        %v871 = vmul.f32 %v861, 1.442695
        %v872 = vpow.pop %v871
        %v873 = vmul.f32 %v862, 1.442695
        %v874 = vpow.pop %v873
        %v875 = vmul.f32 %v863, 1.442695
        %v876 = vpow.pop %v875
        %v877 = vmul.f32 %v864, 1.442695
        %v878 = vpow.pop %v877
        %v879 = vmul.f32 %v865, 1.442695
        %v880 = vpow.pop %v879
        %v881 = vmul.f32 %v866, 1.442695
        %v882 = vpow.pop %v881
        %v883 = vadd.f32 %v868, %v870
        %884 = vadd.xlane.f32.xlu0 %v883
        %v885 = vpop.xlane.xlu0 %884
        %v886 = vadd.f32 %v872, %v874
        %887 = vadd.xlane.f32.xlu0 %v886
        %v888 = vpop.xlane.xlu0 %887
        %v889 = vadd.f32 %v876, %v878
        %890 = vadd.xlane.f32.xlu0 %v889
        %v891 = vpop.xlane.xlu0 %890
        %v892 = vadd.f32 %v880, %v882
        %893 = vadd.xlane.f32.xlu0 %v892
        %v894 = vpop.xlane.xlu0 %893
        %v895 = vadd.f32 %v835, %v885
        %v896 = vadd.f32 %v836, %v888
        %v897 = vadd.f32 %v837, %v891
        %v898 = vadd.f32 %v838, %v894
        %899 = vst.msk [vmem:[#allocation3] sm:$0xff] %vm794, %v895
        %900 = vst.msk [vmem:[#allocation3 + $0x8] sm:$0xff] %vm794, %v896
        %901 = vst.msk [vmem:[#allocation3 + $0x10] sm:$0xff] %vm794, %v897
        %902 = vst.msk [vmem:[#allocation3 + $0x18] sm:$0xff] %vm794, %v898
        %903 = vst.msk [vmem:[#allocation2] sm:$0xff] %vm794, %v815
        %904 = vst.msk [vmem:[#allocation2 + $0x8] sm:$0xff] %vm794, %v816
        %905 = vst.msk [vmem:[#allocation2 + $0x10] sm:$0xff] %vm794, %v817
        %906 = vst.msk [vmem:[#allocation2 + $0x18] sm:$0xff] %vm794, %v818
        %p907 = scmp.eq.s32.totalorder %s35, 1
        // Predicated region
        $region49: #{tpu_custom_call.1} parent=35 // pred_check
          %p908 = pneg %p907
        $region50: #{tpu_custom_call.1} parent=35 // pred_check_branch
          %910 = sbr.rel (%p908) target = $region52
        $region51: #{tpu_custom_call.1} parent=35 // pred_region
          %v911 = vld [vmem:[#allocation2] sm:$0xff]
          %v912 = vld [vmem:[#allocation2 + $0x8] sm:$0xff]
          %v913 = vld [vmem:[#allocation2 + $0x10] sm:$0xff]
          %v914 = vld [vmem:[#allocation2 + $0x18] sm:$0xff]
          %v915 = vld [vmem:[#allocation3] sm:$0xff]
          %v916 = vld [vmem:[#allocation3 + $0x8] sm:$0xff]
          %v917 = vld [vmem:[#allocation3 + $0x10] sm:$0xff]
          %v918 = vld [vmem:[#allocation3 + $0x18] sm:$0xff]
          %v919 = vlog2.pop %v915
          %v920 = vmul.f32 %v919, 0.6931472
          %v921 = vlog2.pop %v916
          %v922 = vmul.f32 %v921, 0.6931472
          %v923 = vlog2.pop %v917
          %v924 = vmul.f32 %v923, 0.6931472
          %v925 = vlog2.pop %v918
          %v926 = vmul.f32 %v925, 0.6931472
          %v927 = vadd.f32 %v911, %v920
          %v928 = vadd.f32 %v912, %v922
          %v929 = vadd.f32 %v913, %v924
          %v930 = vadd.f32 %v914, %v926
          %v931 = vld [vmem:[%s364] sm:$0xff]
          %v932 = vld [vmem:[%s364 + $0x8] sm:$0xff]
          %v933 = vld [vmem:[%s364 + $0x10] sm:$0xff]
          %v934 = vld [vmem:[%s364 + $0x18] sm:$0xff]
          %vm935 = vcmp.ge.s32.totalorder %v931, 0
          %vm936 = vcmp.ge.s32.totalorder %v932, 0
          %vm937 = vcmp.ge.s32.totalorder %v933, 0
          %vm938 = vcmp.ge.s32.totalorder %v934, 0
          %v939 = vsel %vm935, 1, 0
          %v940 = vsel %vm936, 1, 0
          %v941 = vsel %vm937, 1, 0
          %v942 = vsel %vm938, 1, 0
          %v943 = vcvt.s32.f32 %v939
          %v944 = vcvt.s32.f32 %v940
          %v945 = vcvt.s32.f32 %v941
          %v946 = vcvt.s32.f32 %v942
          %v947 = vld [vmem:[#allocation4] sm:$0xff]
          %v948 = vld [vmem:[#allocation4 + $0x8] sm:$0xff]
          %v949 = vld [vmem:[#allocation4 + $0x10] sm:$0xff]
          %v950 = vld [vmem:[#allocation4 + $0x18] sm:$0xff]
          %v951 = vsub.f32 %v927, %v947
          %v952 = vsub.f32 %v928, %v948
          %v953 = vsub.f32 %v929, %v949
          %v954 = vsub.f32 %v930, %v950
          %v955 = vmul.f32 %v943, %v951
          %v956 = vmul.f32 %v944, %v952
          %v957 = vmul.f32 %v945, %v953
          %v958 = vmul.f32 %v946, %v954
          %v959 = vsel %vm794, %v955, 0.0
          %v960 = vsel %vm794, %v956, 0.0
          %v961 = vadd.f32 %v959, %v960
          %v962 = vsel %vm794, %v957, 0.0
          %v963 = vadd.f32 %v961, %v962
          %v964 = vsel %vm794, %v958, 0.0
          %v965 = vadd.f32 %v963, %v964
          %966 = vadd.xlane.f32.xlu0 %v965
          %v967 = vpop.xlane.xlu0 %966
          %v968 = vrot.slane %v967, 4
          %v969 = vadd.f32 %v967, %v968
          %v970 = vrot.slane %v969, 2
          %v971 = vadd.f32 %v969, %v970
          %v972 = vrot.slane %v971, 1
          %v973 = vadd.f32 %v971, %v972
          %s974 = vtos %v973
          %v975 = vstv %s974
          %976 = vst [vmem:[%s357] sm:$0xff] %v975
        $region52: #{tpu_custom_call.1} parent=35 // pred_fallthru
          _
        %s977 = sand.u32 %s149, 1
        %s978 = scalar_lea.sflag [#allocation7], %s977
        %s979 = sand.u32 %s149, 1
        %s980 = smul.addr %s979, 16
        %s981 = scalar_lea.vmem [#allocation10], %s980
        %s982 = sand.u32 %s30, 1
        %s983 = scalar_lea.sflag [#allocation12], %s982
        %s984 = sand.u32 %s177, 1
        %s985 = smul.addr %s984, 32
        %s986 = scalar_lea.vmem [#allocation11], %s985
        %s987 = sand.u32 %s30, 1
        %s988 = scalar_lea.sflag [#allocation12], %s987
        %s989 = sand.u32 %s203, 1
        %s990 = smul.addr %s989, 8
        %s991 = scalar_lea.vmem [#allocation13], %s990
        // Predicated region
        $region53: #{tpu_custom_call.1} parent=35 // pred_check
          %p992 = pneg %p159
        $region54: #{tpu_custom_call.1} parent=35 // pred_check_branch
          %994 = sbr.rel (%p992) target = $region56
        $region55: #{tpu_custom_call.1} parent=35 // pred_region
          %s995 = smul.u32 4, %s34
          %s997 = ssub.s32 256, 256
          %998 = vsyncadd %s978, %s997
          %s999 = smul.addr %s995, 64
          %s1000 = scalar_lea.hbm %s4, %s999
          %s1001 = sshll.u32 %s981, 4
          %s1002 = int_to_ptr.vmem [resolvable:$true] %s1001
          %1007 = dma.vmem_to_hbm [thread:$0]  %s1002, 256, %s1000, %s978, 64, 64, 4
        $region56: #{tpu_custom_call.1} parent=35 // pred_fallthru
          _
        // Predicated region
        $region57: #{tpu_custom_call.1} parent=35 // pred_check
          %p1008 = pneg %p187
        $region58: #{tpu_custom_call.1} parent=35 // pred_check_branch
          %1010 = sbr.rel (%p1008) target = $region60
        $region59: #{tpu_custom_call.1} parent=35 // pred_region
          %s1011 = smul.u32 4, %s34
          %s1012 = smul.u32 2, %s35
          %s1014 = ssub.s32 512, 512
          %1015 = vsyncadd %s983, %s1014
          %s1016 = smul.addr %s1011, 4
          %s1017 = sadd.s32 %s1012, %s1016
          %s1018 = smul.addr %s1017, 64
          %s1019 = scalar_lea.hbm %s5, %s1018
          %s1020 = sshll.u32 %s986, 4
          %s1021 = int_to_ptr.vmem [resolvable:$true] %s1020
          %1026 = dma.vmem_to_hbm [thread:$0]  %s1021, 512, %s1019, %s983, 128, 256, 8
        $region60: #{tpu_custom_call.1} parent=35 // pred_fallthru
          _
        // Predicated region
        $region61: #{tpu_custom_call.1} parent=35 // pred_check
          %p1027 = pneg %p213
        $region62: #{tpu_custom_call.1} parent=35 // pred_check_branch
          %1029 = sbr.rel (%p1027) target = $region64
        $region63: #{tpu_custom_call.1} parent=35 // pred_region
          %s1031 = ssub.s32 128, 128
          %1032 = vsyncadd %s988, %s1031
          %s1033 = smul.addr %s34, 128
          %s1034 = scalar_lea.hbm %s6, %s1033
          %s1036 = sshll.u32 %s991, 4
          %s1037 = int_to_ptr.vmem [resolvable:$true] %s1036
          %1039 = dma.vmem_to_hbm [thread:$0]  %s1037, 128, %s1034, %s988
        $region64: #{tpu_custom_call.1} parent=35 // pred_fallthru
          _
      $region36: #{tpu_custom_call.1} parent=5 // pred_fallthru
        _
      %p1040 = scmp.le.s32.totalorder 2, %s25
      // Predicated region
      $region65: #{tpu_custom_call.1} parent=5 // pred_check
        %p1041 = pneg %p1040
      $region66: #{tpu_custom_call.1} parent=5 // pred_check_branch
        %1043 = sbr.rel (%p1041) target = $region68
      $region67: #{tpu_custom_call.1} parent=5 // pred_region
        %s1044 = ssub.s32 %s25, 2
        // Predicated region
        $region69: #{tpu_custom_call.1} parent=67 // pred_check
          %p1045 = pneg %p165
        $region70: #{tpu_custom_call.1} parent=67 // pred_check_branch
          %1047 = sbr.rel (%p1045) target = $region72
        $region71: #{tpu_custom_call.1} parent=67 // pred_region
          %s1048 = sand.u32 %s150, 1
          %s1049 = scalar_lea.sflag [#allocation7], %s1048
          %s1050 = sand.u32 %s150, 1
          %s1051 = smul.addr %s1050, 16
          %s1052 = scalar_lea.vmem [#allocation10], %s1051
          %1053 = dma.done %s1049, 256
        $region72: #{tpu_custom_call.1} parent=67 // pred_fallthru
          _
        // Predicated region
        $region73: #{tpu_custom_call.1} parent=67 // pred_check
          %p1054 = pneg %p193
        $region74: #{tpu_custom_call.1} parent=67 // pred_check_branch
          %1056 = sbr.rel (%p1054) target = $region76
        $region75: #{tpu_custom_call.1} parent=67 // pred_region
          %s1057 = sand.u32 %s31, 1
          %s1058 = scalar_lea.sflag [#allocation12], %s1057
          %s1059 = sand.u32 %s178, 1
          %s1060 = smul.addr %s1059, 32
          %s1061 = scalar_lea.vmem [#allocation11], %s1060
          %1062 = dma.done %s1058, 512
        $region76: #{tpu_custom_call.1} parent=67 // pred_fallthru
          _
        // Predicated region
        $region77: #{tpu_custom_call.1} parent=67 // pred_check
          %p1063 = pneg %p219
        $region78: #{tpu_custom_call.1} parent=67 // pred_check_branch
          %1065 = sbr.rel (%p1063) target = $region80
        $region79: #{tpu_custom_call.1} parent=67 // pred_region
          %s1066 = sand.u32 %s31, 1
          %s1067 = scalar_lea.sflag [#allocation12], %s1066
          %s1068 = sand.u32 %s204, 1
          %s1069 = smul.addr %s1068, 8
          %s1070 = scalar_lea.vmem [#allocation13], %s1069
          %1071 = dma.done %s1067, 128
        $region80: #{tpu_custom_call.1} parent=67 // pred_fallthru
          _
      $region68: #{tpu_custom_call.1} parent=5 // pred_fallthru
        _
    $region6: #{tpu_custom_call.1} parent=1 // loop_footer
      %s29 = sadd.s32 1, %s25
    $region7: #{tpu_custom_call.1} parent=1 // loop_footer_branch
      %24 = sbr.rel target = $region3
    $region8: #{tpu_custom_call.1} parent=1 // loop_exit
      _
    %1072 = vsyncpa [#allocation6], 1
    %s1073 = scalar_lea.sflag [#allocation6], 1
    %1074 = vsyncpa %s1073, 1
    %1075 = vsyncpa [#allocation9], 1
    %s1076 = scalar_lea.sflag [#allocation9], 1
    %1077 = vsyncpa %s1076, 1
    %1078 = vsyncpa [#allocation7], 1
    %s1079 = scalar_lea.sflag [#allocation7], 1
    %1080 = vsyncpa %s1079, 1
    %1081 = vsyncpa [#allocation12], 1
    %s1082 = scalar_lea.sflag [#allocation12], 1
    %1083 = vsyncpa %s1082, 1

</llo_original>
